<compile_context>
chip_gen: v6e
topology: v6e:2x2x1
jax: 0.10.0
libtpu: 0.0.40
codegen_flags: <defaults>
</compile_context>

<pallas_src>
import functools

import jax
import jax.numpy as jnp
from jax import lax
from jax.experimental import pallas as pl
from jax.experimental.pallas import tpu as pltpu


def _cond_hypersphere_ae_kernel(
    xu_ref,                       # (tile_b, d_x + d_u)  batch-tiled input stream
    w1_ref, w2_ref,               # encoder weights, (in, out) layout
    w3l_ref, w3u_ref, w4_ref,     # decoder weights (layer-1 split for cat(lat, u))
    b_ref,                        # (1, h_e + d_lat + h_d + d_out) merged biases
    out_ref,                      # (tile_b, d_out + d_lat) fused output slab
    *, d_x, h_e, d_lat, h_d, d_out,
):
    xu = xu_ref[...]              # (tb, d_x + d_u)
    u = xu[:, d_x:]               # (tb, d_u)  static lane slice, no second stream

    b = b_ref[...]
    b1 = b[:, 0:h_e]
    b2 = b[:, h_e:h_e + d_lat]
    b3 = b[:, h_e + d_lat:h_e + d_lat + h_d]
    b4 = b[:, h_e + d_lat + h_d:h_e + d_lat + h_d + d_out]

    # ---------------- encoder: Linear(cat(x,u)) -> ReLU -> Linear -------------
    h = jnp.dot(xu, w1_ref[...], preferred_element_type=jnp.float32) + b1
    h = jnp.maximum(h, 0.0)
    e = jnp.dot(h, w2_ref[...], preferred_element_type=jnp.float32) + b2

    # ------------- project onto unit hypersphere: e / ||e||_2 -----------------
    # No epsilon (matches the PyTorch reference): an all-zero encoder row is a
    # documented precondition violation (it would produce NaN there too).
    ss = jnp.sum(e * e, axis=-1, keepdims=True)
    r = lax.rsqrt(ss)
    # One Newton-Raphson step keeps full f32 precision even if the EUP rsqrt
    # path is approximate; cheap VPU muls on a (tb, 1) column.
    r = r * (1.5 - 0.5 * ss * r * r)
    lat = e * r

    # ---------------- decoder: Linear(cat(lat,u)) -> ReLU -> Linear -----------
    hd = jnp.dot(lat, w3l_ref[...], preferred_element_type=jnp.float32)
    hd = hd + jnp.dot(u, w3u_ref[...], preferred_element_type=jnp.float32)
    hd = jnp.maximum(hd + b3, 0.0)
    out = jnp.dot(hd, w4_ref[...], preferred_element_type=jnp.float32) + b4

    # Single (lane-denser) store: [output | latent].
    out_ref[...] = jnp.concatenate([out, lat], axis=-1).astype(out_ref.dtype)


def cond_hypersphere_ae_forward(x, u, params, *, tile_b=256):
    """Fused forward. `params` follow the PyTorch nn.Linear (out, in) convention.

    Returns (output, latent), matching the PyTorch module with
    train_encoder=train_decoder=True and t=None.
    """
    w1, b1, w2, b2, w3, b3, w4, b4 = params
    B, d_x = x.shape
    _, d_u = u.shape
    h_e, d_cat = w1.shape
    d_lat = w2.shape[0]
    h_d = w3.shape[0]
    d_out = w4.shape[0]
    assert d_cat == d_x + d_u and w3.shape[1] == d_lat + d_u

    # Sweepable; keep tile_b a multiple of 8 dividing B. On v7x prefer
    # tile_b <= B // 4 so the "parallel" batch axis gives >= 2 steps per core.
    tile_b = min(tile_b, B)
    assert B % tile_b == 0 and tile_b % 8 == 0, "pick tile_b a multiple of 8 dividing B"

    # `u.float()` from the encoder path of the PyTorch module; x cast too so the
    # pre-concatenated stream has one dtype (identical semantics for f32 inputs).
    # TODO(synk): for v5e/v6e HBM-bound deployments, stream xu / outputs as bf16.
    xf = x.astype(jnp.float32)
    uf = u.astype(jnp.float32)
    xu = jnp.concatenate([xf, uf], axis=1)                  # (B, d_x + d_u)

    # Layout plumbing (free, wrapper-side): weights to (in, out); split decoder
    # layer-1 along its input axis so the kernel never concatenates lat with u.
    w1t = jnp.transpose(w1)                                 # (d_x+d_u, h_e)
    w2t = jnp.transpose(w2)                                 # (h_e,     d_lat)
    w3l = jnp.transpose(w3[:, :d_lat])                      # (d_lat,   h_d)
    w3u = jnp.transpose(w3[:, d_lat:])                      # (d_u,     h_d)
    w4t = jnp.transpose(w4)                                 # (h_d,     d_out)
    b_all = jnp.concatenate([b1, b2, b3, b4]).reshape(1, h_e + d_lat + h_d + d_out)

    kernel = functools.partial(
        _cond_hypersphere_ae_kernel,
        d_x=d_x, h_e=h_e, d_lat=d_lat, h_d=h_d, d_out=d_out)

    def resident(shape):
        # Weights / biases: same block every grid step -> stay resident in VMEM.
        return pl.BlockSpec(shape, lambda i: (0, 0))

    grid = (B // tile_b,)

    outcat = pl.pallas_call(
        kernel,
        out_shape=jax.ShapeDtypeStruct((B, d_out + d_lat), jnp.float32),
        grid=grid,
        in_specs=[
            pl.BlockSpec((tile_b, d_x + d_u), lambda i: (i, 0)),   # batch-tiled stream
            resident(w1t.shape), resident(w2t.shape),
            resident(w3l.shape), resident(w3u.shape), resident(w4t.shape),
            resident(b_all.shape),
        ],
        out_specs=pl.BlockSpec((tile_b, d_out + d_lat), lambda i: (i, 0)),
        compiler_params=pltpu.CompilerParams(
            dimension_semantics=("parallel",),
        ),
    )(xu, w1t, w2t, w3l, w3u, w4t, b_all)

    # Slice the fused slab apart (cheap wrapper-side layout op).
    out = outcat[:, :d_out]
    lat = outcat[:, d_out:]
    return out, lat


def reference_forward(x, u, params):
    """Pure-JAX reference, mirrors the PyTorch forward (train_encoder=train_decoder=True)."""
    w1, b1, w2, b2, w3, b3, w4, b4 = params
    uf = u.astype(jnp.float32)
    xu = jnp.concatenate([x.astype(jnp.float32), uf], axis=1)
    h = jnp.maximum(xu @ w1.T + b1, 0.0)
    e = h @ w2.T + b2
    lat = e / jnp.linalg.norm(e, axis=1, keepdims=True)
    lu = jnp.concatenate([lat, uf], axis=1)
    hd = jnp.maximum(lu @ w3.T + b3, 0.0)
    out = hd @ w4.T + b4
    return out, lat


if __name__ == "__main__":
    # Small feature dims consistent with the module's forward; batch large enough
    # to exercise the tiled pipeline (data is still only ~100 KiB).
    B, D_X, D_U = 1024, 16, 8
    H_E, D_LAT, H_D, D_OUT = 32, 16, 32, 16

    key = jax.random.PRNGKey(0)
    keys = jax.random.split(key, 10)

    x = jax.random.normal(keys[0], (B, D_X), dtype=jnp.float32)
    u = jax.random.normal(keys[1], (B, D_U), dtype=jnp.float32)

    # Synthetic encoder/decoder MLP parameters, PyTorch nn.Linear (out, in) convention.
    w1 = jax.random.normal(keys[2], (H_E, D_X + D_U), dtype=jnp.float32) * 0.1
    b1 = jax.random.normal(keys[3], (H_E,), dtype=jnp.float32) * 0.1
    w2 = jax.random.normal(keys[4], (D_LAT, H_E), dtype=jnp.float32) * 0.1
    b2 = jax.random.normal(keys[5], (D_LAT,), dtype=jnp.float32) * 0.1
    w3 = jax.random.normal(keys[6], (H_D, D_LAT + D_U), dtype=jnp.float32) * 0.1
    b3 = jax.random.normal(keys[7], (H_D,), dtype=jnp.float32) * 0.1
    w4 = jax.random.normal(keys[8], (D_OUT, H_D), dtype=jnp.float32) * 0.1
    b4 = jax.random.normal(keys[9], (D_OUT,), dtype=jnp.float32) * 0.1
    params = (w1, b1, w2, b2, w3, b3, w4, b4)

    # B=1024 / tile_b=256 -> 4 grid steps: both v7x TensorCores get >= 2 steps.
    out, lat = cond_hypersphere_ae_forward(x, u, params, tile_b=256)
    jax.block_until_ready((out, lat))

    out_ref, lat_ref = reference_forward(x, u, params)

    assert out.shape == (B, D_OUT) and lat.shape == (B, D_LAT)
    assert jnp.allclose(lat, lat_ref, atol=1e-5, rtol=1e-5)
    assert jnp.allclose(out, out_ref, atol=1e-5, rtol=1e-5)
    # latent must lie on the unit hypersphere
    norms = jnp.linalg.norm(lat, axis=1)
    assert bool(jnp.all(jnp.abs(norms - 1.0) < 1e-5))

    print("KERNEL_OK")
</pallas_src>

<mosaic_0001>
module attributes {stable_mosaic.version = 11 : i64} {
  func.func @_cond_hypersphere_ae_kernel(%arg0: i32, %arg1: memref<256x24xf32, #tpu.memory_space<vmem>>, %arg2: memref<24x32xf32, #tpu.memory_space<vmem>>, %arg3: memref<32x16xf32, #tpu.memory_space<vmem>>, %arg4: memref<16x32xf32, #tpu.memory_space<vmem>>, %arg5: memref<8x32xf32, #tpu.memory_space<vmem>>, %arg6: memref<32x16xf32, #tpu.memory_space<vmem>>, %arg7: memref<1x96xf32, #tpu.memory_space<vmem>>, %arg8: memref<256x32xf32, #tpu.memory_space<vmem>>) attributes {dimension_semantics = [#tpu.dimension_semantics<parallel>], iteration_bounds = array<i64: 4>, scalar_prefetch = 0 : i64, scratch_operands = 0 : i64, tpu.core_type = #tpu.core_type<tc>, window_params = [{transform_indices = @transform_0, window_bounds = array<i64: 256, 24>}, {pipeline_mode = #tpu.pipeline_mode<synchronous>, transform_indices = @transform_1, window_bounds = array<i64: 24, 32>}, {pipeline_mode = #tpu.pipeline_mode<synchronous>, transform_indices = @transform_2, window_bounds = array<i64: 32, 16>}, {pipeline_mode = #tpu.pipeline_mode<synchronous>, transform_indices = @transform_3, window_bounds = array<i64: 16, 32>}, {pipeline_mode = #tpu.pipeline_mode<synchronous>, transform_indices = @transform_4, window_bounds = array<i64: 8, 32>}, {pipeline_mode = #tpu.pipeline_mode<synchronous>, transform_indices = @transform_5, window_bounds = array<i64: 32, 16>}, {pipeline_mode = #tpu.pipeline_mode<synchronous>, transform_indices = @transform_6, window_bounds = array<i64: 1, 96>}, {transform_indices = @transform_7, window_bounds = array<i64: 256, 32>}]} {
    %c0 = arith.constant 0 : index
    %c0_0 = arith.constant 0 : index
    %0 = vector.load %arg1[%c0, %c0_0] : memref<256x24xf32, #tpu.memory_space<vmem>>, vector<256x24xf32>
    %1 = vector.extract_strided_slice %0 {offsets = [0, 16], sizes = [256, 8], strides = [1, 1]} : vector<256x24xf32> to vector<256x8xf32>
    %c0_1 = arith.constant 0 : index
    %c0_2 = arith.constant 0 : index
    %2 = vector.load %arg7[%c0_1, %c0_2] : memref<1x96xf32, #tpu.memory_space<vmem>>, vector<1x96xf32>
    %3 = vector.extract_strided_slice %2 {offsets = [0, 0], sizes = [1, 32], strides = [1, 1]} : vector<1x96xf32> to vector<1x32xf32>
    %4 = vector.extract_strided_slice %2 {offsets = [0, 32], sizes = [1, 16], strides = [1, 1]} : vector<1x96xf32> to vector<1x16xf32>
    %5 = vector.extract_strided_slice %2 {offsets = [0, 48], sizes = [1, 32], strides = [1, 1]} : vector<1x96xf32> to vector<1x32xf32>
    %6 = vector.extract_strided_slice %2 {offsets = [0, 80], sizes = [1, 16], strides = [1, 1]} : vector<1x96xf32> to vector<1x16xf32>
    %c0_3 = arith.constant 0 : index
    %c0_4 = arith.constant 0 : index
    %7 = vector.load %arg2[%c0_3, %c0_4] : memref<24x32xf32, #tpu.memory_space<vmem>>, vector<24x32xf32>
    %cst = arith.constant dense<0.000000e+00> : vector<256x32xf32>
    %8 = tpu.matmul %0, %7, %cst {dimension_numbers = #tpu.dot_dimension_numbers<[1], [0], [0], [1], [0, 0, 1, 1], [], []>} : vector<256x24xf32>, vector<24x32xf32>, vector<256x32xf32> -> vector<256x32xf32>
    %9 = vector.broadcast %3 : vector<1x32xf32> to vector<256x32xf32>
    %10 = arith.addf %8, %9 : vector<256x32xf32>
    %cst_5 = arith.constant 0.000000e+00 : f32
    %11 = vector.broadcast %cst_5 : f32 to vector<256x32xf32>
    %12 = arith.maximumf %10, %11 : vector<256x32xf32>
    %c0_6 = arith.constant 0 : index
    %c0_7 = arith.constant 0 : index
    %13 = vector.load %arg3[%c0_6, %c0_7] : memref<32x16xf32, #tpu.memory_space<vmem>>, vector<32x16xf32>
    %cst_8 = arith.constant dense<0.000000e+00> : vector<256x16xf32>
    %14 = tpu.matmul %12, %13, %cst_8 {dimension_numbers = #tpu.dot_dimension_numbers<[1], [0], [0], [1], [0, 0, 1, 1], [], []>} : vector<256x32xf32>, vector<32x16xf32>, vector<256x16xf32> -> vector<256x16xf32>
    %15 = vector.broadcast %4 : vector<1x16xf32> to vector<256x16xf32>
    %16 = arith.addf %14, %15 : vector<256x16xf32>
    %17 = arith.mulf %16, %16 : vector<256x16xf32>
    %cst_9 = arith.constant dense<0.000000e+00> : vector<256xf32>
    %18 = vector.multi_reduction <add>, %17, %cst_9 [1] : vector<256x16xf32> to vector<256xf32>
    %19 = vector.shape_cast %18 : vector<256xf32> to vector<256x1xf32>
    %20 = math.rsqrt %19 : vector<256x1xf32>
    %cst_10 = arith.constant 5.000000e-01 : f32
    %21 = vector.broadcast %cst_10 : f32 to vector<256x1xf32>
    %22 = arith.mulf %21, %19 : vector<256x1xf32>
    %23 = arith.mulf %22, %20 : vector<256x1xf32>
    %24 = arith.mulf %23, %20 : vector<256x1xf32>
    %cst_11 = arith.constant 1.500000e+00 : f32
    %25 = vector.broadcast %cst_11 : f32 to vector<256x1xf32>
    %26 = arith.subf %25, %24 : vector<256x1xf32>
    %27 = arith.mulf %20, %26 : vector<256x1xf32>
    %28 = vector.broadcast %27 : vector<256x1xf32> to vector<256x16xf32>
    %29 = arith.mulf %16, %28 : vector<256x16xf32>
    %c0_12 = arith.constant 0 : index
    %c0_13 = arith.constant 0 : index
    %30 = vector.load %arg4[%c0_12, %c0_13] : memref<16x32xf32, #tpu.memory_space<vmem>>, vector<16x32xf32>
    %cst_14 = arith.constant dense<0.000000e+00> : vector<256x32xf32>
    %31 = tpu.matmul %29, %30, %cst_14 {dimension_numbers = #tpu.dot_dimension_numbers<[1], [0], [0], [1], [0, 0, 1, 1], [], []>} : vector<256x16xf32>, vector<16x32xf32>, vector<256x32xf32> -> vector<256x32xf32>
    %c0_15 = arith.constant 0 : index
    %c0_16 = arith.constant 0 : index
    %32 = vector.load %arg5[%c0_15, %c0_16] : memref<8x32xf32, #tpu.memory_space<vmem>>, vector<8x32xf32>
    %cst_17 = arith.constant dense<0.000000e+00> : vector<256x32xf32>
    %33 = tpu.matmul %1, %32, %cst_17 {dimension_numbers = #tpu.dot_dimension_numbers<[1], [0], [0], [1], [0, 0, 1, 1], [], []>} : vector<256x8xf32>, vector<8x32xf32>, vector<256x32xf32> -> vector<256x32xf32>
    %34 = arith.addf %31, %33 : vector<256x32xf32>
    %35 = vector.broadcast %5 : vector<1x32xf32> to vector<256x32xf32>
    %36 = arith.addf %34, %35 : vector<256x32xf32>
    %cst_18 = arith.constant 0.000000e+00 : f32
    %37 = vector.broadcast %cst_18 : f32 to vector<256x32xf32>
    %38 = arith.maximumf %36, %37 : vector<256x32xf32>
    %c0_19 = arith.constant 0 : index
    %c0_20 = arith.constant 0 : index
    %39 = vector.load %arg6[%c0_19, %c0_20] : memref<32x16xf32, #tpu.memory_space<vmem>>, vector<32x16xf32>
    %cst_21 = arith.constant dense<0.000000e+00> : vector<256x16xf32>
    %40 = tpu.matmul %38, %39, %cst_21 {dimension_numbers = #tpu.dot_dimension_numbers<[1], [0], [0], [1], [0, 0, 1, 1], [], []>} : vector<256x32xf32>, vector<32x16xf32>, vector<256x16xf32> -> vector<256x16xf32>
    %41 = vector.broadcast %6 : vector<1x16xf32> to vector<256x16xf32>
    %42 = arith.addf %40, %41 : vector<256x16xf32>
    %43 = tpu.concatenate %42, %29 in 1 : vector<256x16xf32>, vector<256x16xf32> -> vector<256x32xf32>
    %c0_22 = arith.constant 0 : index
    %c0_23 = arith.constant 0 : index
    %44 = vector.load %arg8[%c0_22, %c0_23] : memref<256x32xf32, #tpu.memory_space<vmem>>, vector<256x32xf32>
    tpu.vector_store %arg8[%c0_22, %c0_23], %43 {strides = array<i32>} : memref<256x32xf32, #tpu.memory_space<vmem>>, vector<256x32xf32>,
    return
  }
  func.func @transform_0(%arg0: i32) -> (i32, i32) {
    %c0_i32 = arith.constant 0 : i32
    %c0_i32_0 = arith.constant 0 : i32
    return %arg0, %c0_i32 : i32, i32
  }
  func.func @transform_1(%arg0: i32) -> (i32, i32) {
    %c0_i32 = arith.constant 0 : i32
    %c0_i32_0 = arith.constant 0 : i32
    %c0_i32_1 = arith.constant 0 : i32
    return %c0_i32, %c0_i32_0 : i32, i32
  }
  func.func @transform_2(%arg0: i32) -> (i32, i32) {
    %c0_i32 = arith.constant 0 : i32
    %c0_i32_0 = arith.constant 0 : i32
    %c0_i32_1 = arith.constant 0 : i32
    return %c0_i32, %c0_i32_0 : i32, i32
  }
  func.func @transform_3(%arg0: i32) -> (i32, i32) {
    %c0_i32 = arith.constant 0 : i32
    %c0_i32_0 = arith.constant 0 : i32
    %c0_i32_1 = arith.constant 0 : i32
    return %c0_i32, %c0_i32_0 : i32, i32
  }
  func.func @transform_4(%arg0: i32) -> (i32, i32) {
    %c0_i32 = arith.constant 0 : i32
    %c0_i32_0 = arith.constant 0 : i32
    %c0_i32_1 = arith.constant 0 : i32
    return %c0_i32, %c0_i32_0 : i32, i32
  }
  func.func @transform_5(%arg0: i32) -> (i32, i32) {
    %c0_i32 = arith.constant 0 : i32
    %c0_i32_0 = arith.constant 0 : i32
    %c0_i32_1 = arith.constant 0 : i32
    return %c0_i32, %c0_i32_0 : i32, i32
  }
  func.func @transform_6(%arg0: i32) -> (i32, i32) {
    %c0_i32 = arith.constant 0 : i32
    %c0_i32_0 = arith.constant 0 : i32
    %c0_i32_1 = arith.constant 0 : i32
    return %c0_i32, %c0_i32_0 : i32, i32
  }
  func.func @transform_7(%arg0: i32) -> (i32, i32) {
    %c0_i32 = arith.constant 0 : i32
    %c0_i32_0 = arith.constant 0 : i32
    return %arg0, %c0_i32 : i32, i32
  }
}

</mosaic_0001>

<llo_original>
// kernel: tpu_custom_call.1
$region0: #{tpu_custom_call.1}
  #allocation0 [shape = 'u32[]', space=smem, size = 0x4, offset = 0x4, fixed_abs, tag = 'smem constant byte address 0x4 - core index']
  #allocation1 [shape = 'u32[144,128]{1,0:T(1,128)}', space=vmem, size = 0x12000, scoped, tag = 'internal scratch']
  %s0 = inlined_call_operand.vmem [shape: f32[1024,24], index: 0, kind: input, shape index: {}]
  %s1 = inlined_call_operand.vmem [shape: f32[24,32], index: 1, kind: input, shape index: {}]
  %s2 = inlined_call_operand.vmem [shape: f32[32,16], index: 2, kind: input, shape index: {}]
  %s3 = inlined_call_operand.vmem [shape: f32[16,32], index: 3, kind: input, shape index: {}]
  %s4 = inlined_call_operand.vmem [shape: f32[8,32], index: 4, kind: input, shape index: {}]
  %s5 = inlined_call_operand.vmem [shape: f32[32,16], index: 5, kind: input, shape index: {}]
  %s6 = inlined_call_operand.vmem [shape: f32[1,96], index: 6, kind: input, shape index: {}]
  %s7 = inlined_call_operand.vmem [shape: f32[1024,32], index: 7, kind: output, shape index: {}]
  %s8 = sld [smem:[#allocation0]]
  $region61: #{tpu_custom_call.1} parent=0
    _
  %s10 = ssub.s32 1, %s8
  %s11 = scalar_select 0, %s10, %s8
  loop: start=0, step=1, limit=6
  $region2: #{tpu_custom_call.1} parent=0 // loop_pre_header
    _
  $region3: #{tpu_custom_call.1} parent=0 // loop_header
    %s13 = sphi 0, %s17
    %p14 = scmp.ge.s32.totalorder %s13, 6
    %s23 = sphi 0, %s25
    %s26 = sphi 0, %s23
    %s27 = sphi 0, %s26
    %s43 = sphi 0, %s27
    %s47 = sphi 0, %s47
    %s49 = sphi 0, %s47
    %s50 = sphi 0, %s49
    %s64 = sphi 0, %s50
    %s68 = sphi 0, %s68
    %s70 = sphi 0, %s68
    %s71 = sphi 0, %s70
    %s85 = sphi 0, %s71
    %s89 = sphi 0, %s89
    %s91 = sphi 0, %s89
    %s92 = sphi 0, %s91
    %s106 = sphi 0, %s92
    %s110 = sphi 0, %s110
    %s112 = sphi 0, %s110
    %s113 = sphi 0, %s112
    %s127 = sphi 0, %s113
    %s131 = sphi 0, %s131
    %s133 = sphi 0, %s131
    %s134 = sphi 0, %s133
    %s148 = sphi 0, %s134
    %s152 = sphi 0, %s152
    %s154 = sphi 0, %s152
    %s155 = sphi 0, %s154
    %s169 = sphi 0, %s155
    %s175 = sphi 0, %s177
    %s178 = sphi 0, %s175
    %s179 = sphi 0, %s178
    %s195 = sphi 0, %s179
  $region4: #{tpu_custom_call.1} parent=0 // loop_header_branch
    %16 = sbr.rel (%p14) target = $region8
  $region5: #{tpu_custom_call.1} parent=0 // loop_body
    %s18 = ssub.s32 %s13, 1
    %s19 = ssub.s32 %s13, 2
    %s20 = sadd.s32 %s13, 1
    %s21 = ssub.s32 %s13, %s20
    %p22 = scmp.eq.s32.totalorder %s21, 0
    %s24 = sadd.s32 %s23, 1
    %s25 = scalar_select %p22, %s23, %s24
    %p28 = pneg %p22
    %p29 = scmp.eq.s32.totalorder %s13, 3
    %p30 = por %p28, %p29
    %p31 = scmp.ne.s32.totalorder %s23, %s26
    %p32 = scmp.eq.s32.totalorder %s13, 0
    %p33 = por %p31, %p32
    %p34 = scmp.ne.s32.totalorder %s23, %s26
    %p35 = scmp.eq.s32.totalorder %s18, 3
    %p36 = por %p34, %p35
    %p37 = scmp.ne.s32.totalorder %s26, %s27
    %p38 = scmp.eq.s32.totalorder %s18, 0
    %p39 = por %p37, %p38
    %p40 = scmp.ne.s32.totalorder %s26, %s27
    %p41 = scmp.eq.s32.totalorder %s19, 3
    %p42 = por %p40, %p41
    %p44 = scmp.ne.s32.totalorder %s27, %s43
    %p45 = scmp.eq.s32.totalorder %s19, 0
    %p46 = por %p44, %p45
    %s48 = sadd.s32 %s47, 1
    %p51 = scmp.eq.s32.totalorder %s13, 3
    %p52 = scmp.ne.s32.totalorder %s47, %s49
    %p53 = scmp.eq.s32.totalorder %s13, 0
    %p54 = por %p52, %p53
    %p55 = scmp.ne.s32.totalorder %s47, %s49
    %p56 = scmp.eq.s32.totalorder %s18, 3
    %p57 = por %p55, %p56
    %p58 = scmp.ne.s32.totalorder %s49, %s50
    %p59 = scmp.eq.s32.totalorder %s18, 0
    %p60 = por %p58, %p59
    %p61 = scmp.ne.s32.totalorder %s49, %s50
    %p62 = scmp.eq.s32.totalorder %s19, 3
    %p63 = por %p61, %p62
    %p65 = scmp.ne.s32.totalorder %s50, %s64
    %p66 = scmp.eq.s32.totalorder %s19, 0
    %p67 = por %p65, %p66
    %s69 = sadd.s32 %s68, 1
    %p72 = scmp.eq.s32.totalorder %s13, 3
    %p73 = scmp.ne.s32.totalorder %s68, %s70
    %p74 = scmp.eq.s32.totalorder %s13, 0
    %p75 = por %p73, %p74
    %p76 = scmp.ne.s32.totalorder %s68, %s70
    %p77 = scmp.eq.s32.totalorder %s18, 3
    %p78 = por %p76, %p77
    %p79 = scmp.ne.s32.totalorder %s70, %s71
    %p80 = scmp.eq.s32.totalorder %s18, 0
    %p81 = por %p79, %p80
    %p82 = scmp.ne.s32.totalorder %s70, %s71
    %p83 = scmp.eq.s32.totalorder %s19, 3
    %p84 = por %p82, %p83
    %p86 = scmp.ne.s32.totalorder %s71, %s85
    %p87 = scmp.eq.s32.totalorder %s19, 0
    %p88 = por %p86, %p87
    %s90 = sadd.s32 %s89, 1
    %p93 = scmp.eq.s32.totalorder %s13, 3
    %p94 = scmp.ne.s32.totalorder %s89, %s91
    %p95 = scmp.eq.s32.totalorder %s13, 0
    %p96 = por %p94, %p95
    %p97 = scmp.ne.s32.totalorder %s89, %s91
    %p98 = scmp.eq.s32.totalorder %s18, 3
    %p99 = por %p97, %p98
    %p100 = scmp.ne.s32.totalorder %s91, %s92
    %p101 = scmp.eq.s32.totalorder %s18, 0
    %p102 = por %p100, %p101
    %p103 = scmp.ne.s32.totalorder %s91, %s92
    %p104 = scmp.eq.s32.totalorder %s19, 3
    %p105 = por %p103, %p104
    %p107 = scmp.ne.s32.totalorder %s92, %s106
    %p108 = scmp.eq.s32.totalorder %s19, 0
    %p109 = por %p107, %p108
    %s111 = sadd.s32 %s110, 1
    %p114 = scmp.eq.s32.totalorder %s13, 3
    %p115 = scmp.ne.s32.totalorder %s110, %s112
    %p116 = scmp.eq.s32.totalorder %s13, 0
    %p117 = por %p115, %p116
    %p118 = scmp.ne.s32.totalorder %s110, %s112
    %p119 = scmp.eq.s32.totalorder %s18, 3
    %p120 = por %p118, %p119
    %p121 = scmp.ne.s32.totalorder %s112, %s113
    %p122 = scmp.eq.s32.totalorder %s18, 0
    %p123 = por %p121, %p122
    %p124 = scmp.ne.s32.totalorder %s112, %s113
    %p125 = scmp.eq.s32.totalorder %s19, 3
    %p126 = por %p124, %p125
    %p128 = scmp.ne.s32.totalorder %s113, %s127
    %p129 = scmp.eq.s32.totalorder %s19, 0
    %p130 = por %p128, %p129
    %s132 = sadd.s32 %s131, 1
    %p135 = scmp.eq.s32.totalorder %s13, 3
    %p136 = scmp.ne.s32.totalorder %s131, %s133
    %p137 = scmp.eq.s32.totalorder %s13, 0
    %p138 = por %p136, %p137
    %p139 = scmp.ne.s32.totalorder %s131, %s133
    %p140 = scmp.eq.s32.totalorder %s18, 3
    %p141 = por %p139, %p140
    %p142 = scmp.ne.s32.totalorder %s133, %s134
    %p143 = scmp.eq.s32.totalorder %s18, 0
    %p144 = por %p142, %p143
    %p145 = scmp.ne.s32.totalorder %s133, %s134
    %p146 = scmp.eq.s32.totalorder %s19, 3
    %p147 = por %p145, %p146
    %p149 = scmp.ne.s32.totalorder %s134, %s148
    %p150 = scmp.eq.s32.totalorder %s19, 0
    %p151 = por %p149, %p150
    %s153 = sadd.s32 %s152, 1
    %p156 = scmp.eq.s32.totalorder %s13, 3
    %p157 = scmp.ne.s32.totalorder %s152, %s154
    %p158 = scmp.eq.s32.totalorder %s13, 0
    %p159 = por %p157, %p158
    %p160 = scmp.ne.s32.totalorder %s152, %s154
    %p161 = scmp.eq.s32.totalorder %s18, 3
    %p162 = por %p160, %p161
    %p163 = scmp.ne.s32.totalorder %s154, %s155
    %p164 = scmp.eq.s32.totalorder %s18, 0
    %p165 = por %p163, %p164
    %p166 = scmp.ne.s32.totalorder %s154, %s155
    %p167 = scmp.eq.s32.totalorder %s19, 3
    %p168 = por %p166, %p167
    %p170 = scmp.ne.s32.totalorder %s155, %s169
    %p171 = scmp.eq.s32.totalorder %s19, 0
    %p172 = por %p170, %p171
    %s173 = ssub.s32 %s13, %s20
    %p174 = scmp.eq.s32.totalorder %s173, 0
    %s176 = sadd.s32 %s175, 1
    %s177 = scalar_select %p174, %s175, %s176
    %p180 = pneg %p174
    %p181 = scmp.eq.s32.totalorder %s13, 3
    %p182 = por %p180, %p181
    %p183 = scmp.ne.s32.totalorder %s175, %s178
    %p184 = scmp.eq.s32.totalorder %s13, 0
    %p185 = por %p183, %p184
    %p186 = scmp.ne.s32.totalorder %s175, %s178
    %p187 = scmp.eq.s32.totalorder %s18, 3
    %p188 = por %p186, %p187
    %p189 = scmp.ne.s32.totalorder %s178, %s179
    %p190 = scmp.eq.s32.totalorder %s18, 0
    %p191 = por %p189, %p190
    %p192 = scmp.ne.s32.totalorder %s178, %s179
    %p193 = scmp.eq.s32.totalorder %s19, 3
    %p194 = por %p192, %p193
    %p196 = scmp.ne.s32.totalorder %s179, %s195
    %p197 = scmp.eq.s32.totalorder %s19, 0
    %p198 = por %p196, %p197
    %p199 = scmp.le.s32.totalorder 1, %s13
    %p200 = scmp.lt.s32.totalorder %s13, 5
    %p201 = pnand %p199, %p200
    %p202 = pneg %p201
    // Predicated region
    $region9: #{tpu_custom_call.1} parent=5 // pred_check
      _
    $region10: #{tpu_custom_call.1} parent=5 // pred_check_branch
      %204 = sbr.rel (%p201) target = $region12
    $region11: #{tpu_custom_call.1} parent=5 // pred_region
      %s205 = ssub.s32 %s13, 1
      // Predicated region
      $region13: #{tpu_custom_call.1} parent=11 // pred_check
        %p206 = pneg %p60
      $region14: #{tpu_custom_call.1} parent=11 // pred_check_branch
        %208 = sbr.rel (%p206) target = $region16
      $region15: #{tpu_custom_call.1} parent=11 // pred_region
        _
      $region16: #{tpu_custom_call.1} parent=11 // pred_fallthru
        _
      // Predicated region
      $region17: #{tpu_custom_call.1} parent=11 // pred_check
        %p209 = pneg %p81
      $region18: #{tpu_custom_call.1} parent=11 // pred_check_branch
        %211 = sbr.rel (%p209) target = $region20
      $region19: #{tpu_custom_call.1} parent=11 // pred_region
        _
      $region20: #{tpu_custom_call.1} parent=11 // pred_fallthru
        _
      // Predicated region
      $region21: #{tpu_custom_call.1} parent=11 // pred_check
        %p212 = pneg %p102
      $region22: #{tpu_custom_call.1} parent=11 // pred_check_branch
        %214 = sbr.rel (%p212) target = $region24
      $region23: #{tpu_custom_call.1} parent=11 // pred_region
        _
      $region24: #{tpu_custom_call.1} parent=11 // pred_fallthru
        _
      // Predicated region
      $region25: #{tpu_custom_call.1} parent=11 // pred_check
        %p215 = pneg %p123
      $region26: #{tpu_custom_call.1} parent=11 // pred_check_branch
        %217 = sbr.rel (%p215) target = $region28
      $region27: #{tpu_custom_call.1} parent=11 // pred_region
        _
      $region28: #{tpu_custom_call.1} parent=11 // pred_fallthru
        _
      // Predicated region
      $region29: #{tpu_custom_call.1} parent=11 // pred_check
        %p218 = pneg %p144
      $region30: #{tpu_custom_call.1} parent=11 // pred_check_branch
        %220 = sbr.rel (%p218) target = $region32
      $region31: #{tpu_custom_call.1} parent=11 // pred_region
        _
      $region32: #{tpu_custom_call.1} parent=11 // pred_fallthru
        _
      // Predicated region
      $region33: #{tpu_custom_call.1} parent=11 // pred_check
        %p221 = pneg %p165
      $region34: #{tpu_custom_call.1} parent=11 // pred_check_branch
        %223 = sbr.rel (%p221) target = $region36
      $region35: #{tpu_custom_call.1} parent=11 // pred_region
        _
      $region36: #{tpu_custom_call.1} parent=11 // pred_fallthru
        _
    $region12: #{tpu_custom_call.1} parent=5 // pred_fallthru
      _
    %p224 = scmp.lt.s32.totalorder %s13, 4
    // Predicated region
    $region37: #{tpu_custom_call.1} parent=5 // pred_check
      %p225 = pneg %p224
    $region38: #{tpu_custom_call.1} parent=5 // pred_check_branch
      %227 = sbr.rel (%p225) target = $region40
    $region39: #{tpu_custom_call.1} parent=5 // pred_region
      // Predicated region
      $region41: #{tpu_custom_call.1} parent=39 // pred_check
        %p228 = pneg %p33
      $region42: #{tpu_custom_call.1} parent=39 // pred_check_branch
        %230 = sbr.rel (%p228) target = $region44
      $region43: #{tpu_custom_call.1} parent=39 // pred_region
        %s231 = smul.u32 32, %s13
        %p232 = scmp.lt.s32.totalorder %s231, 127
        %s233 = scalar_select %p232, %s231, 127
        %s234 = smul.addr %s233, 8
        %s235 = scalar_lea.vmem %s0, %s234
        %s236 = smul.u32 32, %s13
      $region44: #{tpu_custom_call.1} parent=39 // pred_fallthru
        _
    $region40: #{tpu_custom_call.1} parent=5 // pred_fallthru
      _
    %p237 = scmp.le.s32.totalorder 1, %s13
    %p238 = scmp.lt.s32.totalorder %s13, 5
    %p239 = pnand %p237, %p238
    %p240 = pneg %p239
    // Predicated region
    $region45: #{tpu_custom_call.1} parent=5 // pred_check
      _
    $region46: #{tpu_custom_call.1} parent=5 // pred_check_branch
      %242 = sbr.rel (%p239) target = $region48
    $region47: #{tpu_custom_call.1} parent=5 // pred_region
      %s243 = ssub.s32 %s13, 1
      %s244 = smul.u32 32, %s18
      %p245 = scmp.lt.s32.totalorder %s244, 127
      %s246 = scalar_select %p245, %s244, 127
      %s247 = smul.addr %s246, 8
      %s248 = scalar_lea.vmem %s0, %s247
      %p249 = pneg %p39
      %p250 = pneg %p36
      %p251 = pneg %p60
      %p252 = pneg %p57
      %p253 = pneg %p81
      %p254 = pneg %p78
      %p255 = pneg %p102
      %p256 = pneg %p99
      %p257 = pneg %p123
      %p258 = pneg %p120
      %p259 = pneg %p144
      %p260 = pneg %p141
      %p261 = pneg %p165
      %p262 = pneg %p162
      %p263 = pneg %p191
      %p264 = pneg %p188
      %s265 = smul.u32 32, %s18
      %p266 = scmp.lt.s32.totalorder %s265, 127
      %s267 = scalar_select %p266, %s265, 127
      %s268 = smul.addr %s267, 8
      %s269 = scalar_lea.vmem %s7, %s268
      %s270 = smul.u32 32, %s18
      %p271 = scmp.lt.s32.totalorder %s270, 127
      %s272 = scalar_select %p271, %s270, 127
      %s273 = smul.addr %s272, 8
      %s274 = scalar_lea.vmem %s0, %s273
      %s275 = smul.u32 32, %s18
      %s276 = smul.u32 32, %s18
      %p277 = scmp.lt.s32.totalorder %s276, 127
      %s278 = scalar_select %p277, %s276, 127
      %s279 = smul.addr %s278, 8
      %s280 = scalar_lea.vmem %s7, %s279
      %s281 = smul.u32 32, %s18
      %v282 = vld [vmem:[%s274] sm:$0xff]
      %v283 = vld [vmem:[%s274 + $0x8] sm:$0xff]
      %v284 = vld [vmem:[%s274 + $0x10] sm:$0xff]
      %v285 = vld [vmem:[%s274 + $0x18] sm:$0xff]
      %v286 = vld [vmem:[%s274 + $0x20] sm:$0xff]
      %v287 = vld [vmem:[%s274 + $0x28] sm:$0xff]
      %v288 = vld [vmem:[%s274 + $0x30] sm:$0xff]
      %v289 = vld [vmem:[%s274 + $0x38] sm:$0xff]
      %v290 = vld [vmem:[%s274 + $0x40] sm:$0xff]
      %v291 = vld [vmem:[%s274 + $0x48] sm:$0xff]
      %v292 = vld [vmem:[%s274 + $0x50] sm:$0xff]
      %v293 = vld [vmem:[%s274 + $0x58] sm:$0xff]
      %v294 = vld [vmem:[%s274 + $0x60] sm:$0xff]
      %v295 = vld [vmem:[%s274 + $0x68] sm:$0xff]
      %v296 = vld [vmem:[%s274 + $0x70] sm:$0xff]
      %v297 = vld [vmem:[%s274 + $0x78] sm:$0xff]
      %v298 = vld [vmem:[%s274 + $0x80] sm:$0xff]
      %v299 = vld [vmem:[%s274 + $0x88] sm:$0xff]
      %v300 = vld [vmem:[%s274 + $0x90] sm:$0xff]
      %v301 = vld [vmem:[%s274 + $0x98] sm:$0xff]
      %v302 = vld [vmem:[%s274 + $0xa0] sm:$0xff]
      %v303 = vld [vmem:[%s274 + $0xa8] sm:$0xff]
      %v304 = vld [vmem:[%s274 + $0xb0] sm:$0xff]
      %v305 = vld [vmem:[%s274 + $0xb8] sm:$0xff]
      %v306 = vld [vmem:[%s274 + $0xc0] sm:$0xff]
      %v307 = vld [vmem:[%s274 + $0xc8] sm:$0xff]
      %v308 = vld [vmem:[%s274 + $0xd0] sm:$0xff]
      %v309 = vld [vmem:[%s274 + $0xd8] sm:$0xff]
      %v310 = vld [vmem:[%s274 + $0xe0] sm:$0xff]
      %v311 = vld [vmem:[%s274 + $0xe8] sm:$0xff]
      %v312 = vld [vmem:[%s274 + $0xf0] sm:$0xff]
      %v313 = vld [vmem:[%s274 + $0xf8] sm:$0xff]
      %v314 = vld [vmem:[%s6] sm:$0x1]
      %v315 = vld [vmem:[%s1] sm:$0xff]
      %v316 = vld [vmem:[%s1 + $0x8] sm:$0xff]
      %v317 = vld [vmem:[%s1 + $0x10] sm:$0xff]
      %v319 = vlaneseq
      %v320 = vshrl.u32 %v319, 7
      %v321 = vsub.s32 0, %v320
      %v322 = vrot.slane %v314, %v321
      %vm324 = vcmask 195584
      %v326 = vsel %vm324, %v282, 0
      %v329 = vsel %vm324, %v283, 0
      %v332 = vsel %vm324, %v284, 0
      %v335 = vsel %vm324, %v285, 0
      %v338 = vsel %vm324, %v286, 0
      %v341 = vsel %vm324, %v287, 0
      %v344 = vsel %vm324, %v288, 0
      %v347 = vsel %vm324, %v289, 0
      %v350 = vsel %vm324, %v290, 0
      %v353 = vsel %vm324, %v291, 0
      %v356 = vsel %vm324, %v292, 0
      %v359 = vsel %vm324, %v293, 0
      %v362 = vsel %vm324, %v294, 0
      %v365 = vsel %vm324, %v295, 0
      %v368 = vsel %vm324, %v296, 0
      %v371 = vsel %vm324, %v297, 0
      %v374 = vsel %vm324, %v298, 0
      %v377 = vsel %vm324, %v299, 0
      %v380 = vsel %vm324, %v300, 0
      %v383 = vsel %vm324, %v301, 0
      %v386 = vsel %vm324, %v302, 0
      %v389 = vsel %vm324, %v303, 0
      %v392 = vsel %vm324, %v304, 0
      %v395 = vsel %vm324, %v305, 0
      %v398 = vsel %vm324, %v306, 0
      %v401 = vsel %vm324, %v307, 0
      %v404 = vsel %vm324, %v308, 0
      %v407 = vsel %vm324, %v309, 0
      %v410 = vsel %vm324, %v310, 0
      %v413 = vsel %vm324, %v311, 0
      %v416 = vsel %vm324, %v312, 0
      %v419 = vsel %vm324, %v313, 0
      %421 = vmatprep.subr.mxu0 0.0
      %422 = vmatpush1.msra.mxu0 0.0
      %423 = vmatprep.subr.mxu0 0.0
      %424 = vmatpush1.msra.mxu0 0.0
      %425 = vmatprep.subr.mxu0 0.0
      %426 = vmatpush1.msra.mxu0 0.0
      %427 = vmatprep.subr.mxu0 0.0
      %428 = vmatpush1.msra.mxu0 0.0
      %429 = vmatprep.subr.mxu0 0.0
      %430 = vmatpush1.msra.mxu0 0.0
      %431 = vmatprep.subr.mxu0 0.0
      %432 = vmatpush1.msra.mxu0 0.0
      %433 = vmatprep.subr.mxu0 0.0
      %434 = vmatpush1.msra.mxu0 0.0
      %435 = vmatprep.subr.mxu0 0.0
      %436 = vmatpush1.msra.mxu0 0.0
      %437 = vmatprep.subr.mxu0 0.0
      %438 = vmatpush1.msra.mxu0 0.0
      %439 = vmatprep.subr.mxu0 0.0
      %440 = vmatpush1.msra.mxu0 0.0
      %441 = vmatprep.subr.mxu0 0.0
      %442 = vmatpush1.msra.mxu0 0.0
      %443 = vmatprep.subr.mxu0 0.0
      %444 = vmatpush1.msra.mxu0 0.0
      %445 = vmatprep.subr.mxu0 0.0
      %446 = vmatpush1.msra.mxu0 0.0
      %447 = vmatprep.subr.mxu0 0.0
      %448 = vmatpush1.msra.mxu0 %v317
      %449 = vmatprep.subr.mxu0 0.0
      %450 = vmatpush1.msra.mxu0 %v316
      %451 = vmatprep.subr.mxu0 0.0
      %452 = vmatpush1.msra.mxu0 %v315
      %453 = vmatprep.subr.mxu0 0.0
      %454 = vmatpush2.msra.mxu0 0.0
      %455 = vmatprep.subr.mxu0 0.0
      %456 = vmatpush2.msra.mxu0 0.0
      %457 = vmatprep.subr.mxu0 0.0
      %458 = vmatpush2.msra.mxu0 0.0
      %459 = vmatprep.subr.mxu0 0.0
      %460 = vmatpush2.msra.mxu0 0.0
      %461 = vmatprep.subr.mxu0 0.0
      %462 = vmatpush2.msra.mxu0 0.0
      %463 = vmatprep.subr.mxu0 0.0
      %464 = vmatpush2.msra.mxu0 0.0
      %465 = vmatprep.subr.mxu0 0.0
      %466 = vmatpush2.msra.mxu0 0.0
      %467 = vmatprep.subr.mxu0 0.0
      %468 = vmatpush2.msra.mxu0 0.0
      %469 = vmatprep.subr.mxu0 0.0
      %470 = vmatpush2.msra.mxu0 0.0
      %471 = vmatprep.subr.mxu0 0.0
      %472 = vmatpush2.msra.mxu0 0.0
      %473 = vmatprep.subr.mxu0 0.0
      %474 = vmatpush2.msra.mxu0 0.0
      %475 = vmatprep.subr.mxu0 0.0
      %476 = vmatpush2.msra.mxu0 0.0
      %477 = vmatprep.subr.mxu0 0.0
      %478 = vmatpush2.msra.mxu0 0.0
      %479 = vmatprep.subr.mxu0 0.0
      %480 = vmatpush2.msra.mxu0 0.0
      %481 = vmatprep.subr.mxu0 0.0
      %482 = vmatpush2.msra.mxu0 0.0
      %483 = vmatprep.subr.mxu0 0.0
      %484 = vmatpush2.msra.mxu0 0.0
      %485 = vmatprep.mubr.f32.mxu0 0.0
      %486 = vmatmul.mubr.f32.gmra.mxu0 %v326
      %v487 = vpop.f32.mrf.mxu0
      %v488 = vadd.f32 %v322, %v487
      %v489 = vpop.f32.mrf.mxu0
      %490 = vmatprep.mubr.f32.mxu0 0.0
      %491 = vmatmul.mubr.f32.gmra.mxu0 %v329
      %v492 = vpop.f32.mrf.mxu0
      %v493 = vadd.f32 %v322, %v492
      %v494 = vpop.f32.mrf.mxu0
      %495 = vmatprep.mubr.f32.mxu0 0.0
      %496 = vmatmul.mubr.f32.gmra.mxu0 %v332
      %v497 = vpop.f32.mrf.mxu0
      %v498 = vadd.f32 %v322, %v497
      %v499 = vpop.f32.mrf.mxu0
      %500 = vmatprep.mubr.f32.mxu0 0.0
      %501 = vmatmul.mubr.f32.gmra.mxu0 %v335
      %v502 = vpop.f32.mrf.mxu0
      %v503 = vadd.f32 %v322, %v502
      %v504 = vpop.f32.mrf.mxu0
      %505 = vmatprep.mubr.f32.mxu0 0.0
      %506 = vmatmul.mubr.f32.gmra.mxu0 %v338
      %v507 = vpop.f32.mrf.mxu0
      %v508 = vadd.f32 %v322, %v507
      %v509 = vpop.f32.mrf.mxu0
      %510 = vmatprep.mubr.f32.mxu0 0.0
      %511 = vmatmul.mubr.f32.gmra.mxu0 %v341
      %v512 = vpop.f32.mrf.mxu0
      %v513 = vadd.f32 %v322, %v512
      %v514 = vpop.f32.mrf.mxu0
      %515 = vmatprep.mubr.f32.mxu0 0.0
      %516 = vmatmul.mubr.f32.gmra.mxu0 %v344
      %v517 = vpop.f32.mrf.mxu0
      %v518 = vadd.f32 %v322, %v517
      %v519 = vpop.f32.mrf.mxu0
      %520 = vmatprep.mubr.f32.mxu0 0.0
      %521 = vmatmul.mubr.f32.gmra.mxu0 %v347
      %v522 = vpop.f32.mrf.mxu0
      %v523 = vadd.f32 %v322, %v522
      %v524 = vpop.f32.mrf.mxu0
      %525 = vmatprep.mubr.f32.mxu0 0.0
      %526 = vmatmul.mubr.f32.gmra.mxu0 %v350
      %v527 = vpop.f32.mrf.mxu0
      %v528 = vadd.f32 %v322, %v527
      %v529 = vpop.f32.mrf.mxu0
      %530 = vmatprep.mubr.f32.mxu0 0.0
      %531 = vmatmul.mubr.f32.gmra.mxu0 %v353
      %v532 = vpop.f32.mrf.mxu0
      %v533 = vadd.f32 %v322, %v532
      %v534 = vpop.f32.mrf.mxu0
      %535 = vmatprep.mubr.f32.mxu0 0.0
      %536 = vmatmul.mubr.f32.gmra.mxu0 %v356
      %v537 = vpop.f32.mrf.mxu0
      %v538 = vadd.f32 %v322, %v537
      %v539 = vpop.f32.mrf.mxu0
      %540 = vmatprep.mubr.f32.mxu0 0.0
      %541 = vmatmul.mubr.f32.gmra.mxu0 %v359
      %v542 = vpop.f32.mrf.mxu0
      %v543 = vadd.f32 %v322, %v542
      %v544 = vpop.f32.mrf.mxu0
      %545 = vmatprep.mubr.f32.mxu0 0.0
      %546 = vmatmul.mubr.f32.gmra.mxu0 %v362
      %v547 = vpop.f32.mrf.mxu0
      %v548 = vadd.f32 %v322, %v547
      %v549 = vpop.f32.mrf.mxu0
      %550 = vmatprep.mubr.f32.mxu0 0.0
      %551 = vmatmul.mubr.f32.gmra.mxu0 %v365
      %v552 = vpop.f32.mrf.mxu0
      %v553 = vadd.f32 %v322, %v552
      %v554 = vpop.f32.mrf.mxu0
      %555 = vmatprep.mubr.f32.mxu0 0.0
      %556 = vmatmul.mubr.f32.gmra.mxu0 %v368
      %v557 = vpop.f32.mrf.mxu0
      %v558 = vadd.f32 %v322, %v557
      %v559 = vpop.f32.mrf.mxu0
      %560 = vmatprep.mubr.f32.mxu0 0.0
      %561 = vmatmul.mubr.f32.gmra.mxu0 %v371
      %v562 = vpop.f32.mrf.mxu0
      %v563 = vadd.f32 %v322, %v562
      %v564 = vpop.f32.mrf.mxu0
      %565 = vmatprep.mubr.f32.mxu0 0.0
      %566 = vmatmul.mubr.f32.gmra.mxu0 %v374
      %v567 = vpop.f32.mrf.mxu0
      %v568 = vadd.f32 %v322, %v567
      %v569 = vpop.f32.mrf.mxu0
      %570 = vmatprep.mubr.f32.mxu0 0.0
      %571 = vmatmul.mubr.f32.gmra.mxu0 %v377
      %v572 = vpop.f32.mrf.mxu0
      %v573 = vadd.f32 %v322, %v572
      %v574 = vpop.f32.mrf.mxu0
      %575 = vmatprep.mubr.f32.mxu0 0.0
      %576 = vmatmul.mubr.f32.gmra.mxu0 %v380
      %v577 = vpop.f32.mrf.mxu0
      %v578 = vadd.f32 %v322, %v577
      %v579 = vpop.f32.mrf.mxu0
      %580 = vmatprep.mubr.f32.mxu0 0.0
      %581 = vmatmul.mubr.f32.gmra.mxu0 %v383
      %v582 = vpop.f32.mrf.mxu0
      %v583 = vadd.f32 %v322, %v582
      %v584 = vpop.f32.mrf.mxu0
      %585 = vmatprep.mubr.f32.mxu0 0.0
      %586 = vmatmul.mubr.f32.gmra.mxu0 %v386
      %v587 = vpop.f32.mrf.mxu0
      %v588 = vadd.f32 %v322, %v587
      %v589 = vpop.f32.mrf.mxu0
      %590 = vmatprep.mubr.f32.mxu0 0.0
      %591 = vmatmul.mubr.f32.gmra.mxu0 %v389
      %v592 = vpop.f32.mrf.mxu0
      %v593 = vadd.f32 %v322, %v592
      %v594 = vpop.f32.mrf.mxu0
      %595 = vmatprep.mubr.f32.mxu0 0.0
      %596 = vmatmul.mubr.f32.gmra.mxu0 %v392
      %v597 = vpop.f32.mrf.mxu0
      %v598 = vadd.f32 %v322, %v597
      %v599 = vpop.f32.mrf.mxu0
      %600 = vmatprep.mubr.f32.mxu0 0.0
      %601 = vmatmul.mubr.f32.gmra.mxu0 %v395
      %v602 = vpop.f32.mrf.mxu0
      %v603 = vadd.f32 %v322, %v602
      %v604 = vpop.f32.mrf.mxu0
      %605 = vmatprep.mubr.f32.mxu0 0.0
      %606 = vmatmul.mubr.f32.gmra.mxu0 %v398
      %v607 = vpop.f32.mrf.mxu0
      %v608 = vadd.f32 %v322, %v607
      %v609 = vpop.f32.mrf.mxu0
      %610 = vmatprep.mubr.f32.mxu0 0.0
      %611 = vmatmul.mubr.f32.gmra.mxu0 %v401
      %v612 = vpop.f32.mrf.mxu0
      %v613 = vadd.f32 %v322, %v612
      %v614 = vpop.f32.mrf.mxu0
      %615 = vmatprep.mubr.f32.mxu0 0.0
      %616 = vmatmul.mubr.f32.gmra.mxu0 %v404
      %v617 = vpop.f32.mrf.mxu0
      %v618 = vadd.f32 %v322, %v617
      %v619 = vpop.f32.mrf.mxu0
      %620 = vmatprep.mubr.f32.mxu0 0.0
      %621 = vmatmul.mubr.f32.gmra.mxu0 %v407
      %v622 = vpop.f32.mrf.mxu0
      %v623 = vadd.f32 %v322, %v622
      %v624 = vpop.f32.mrf.mxu0
      %625 = vmatprep.mubr.f32.mxu0 0.0
      %626 = vmatmul.mubr.f32.gmra.mxu0 %v410
      %v627 = vpop.f32.mrf.mxu0
      %v628 = vadd.f32 %v322, %v627
      %v629 = vpop.f32.mrf.mxu0
      %630 = vmatprep.mubr.f32.mxu0 0.0
      %631 = vmatmul.mubr.f32.gmra.mxu0 %v413
      %v632 = vpop.f32.mrf.mxu0
      %v633 = vadd.f32 %v322, %v632
      %v634 = vpop.f32.mrf.mxu0
      %635 = vmatprep.mubr.f32.mxu0 0.0
      %636 = vmatmul.mubr.f32.gmra.mxu0 %v416
      %v637 = vpop.f32.mrf.mxu0
      %v638 = vadd.f32 %v322, %v637
      %v639 = vpop.f32.mrf.mxu0
      %640 = vmatprep.mubr.f32.mxu0 0.0
      %641 = vmatmul.mubr.f32.gmra.mxu0 %v419
      %v642 = vpop.f32.mrf.mxu0
      %v643 = vadd.f32 %v322, %v642
      %v644 = vpop.f32.mrf.mxu0
      %645 = vdwg.mxu0
      %v646 = vmax.f32 %v488, 0.0
      %v647 = vmax.f32 %v493, 0.0
      %v648 = vmax.f32 %v498, 0.0
      %v649 = vmax.f32 %v503, 0.0
      %v650 = vmax.f32 %v508, 0.0
      %v651 = vmax.f32 %v513, 0.0
      %v652 = vmax.f32 %v518, 0.0
      %v653 = vmax.f32 %v523, 0.0
      %v654 = vmax.f32 %v528, 0.0
      %v655 = vmax.f32 %v533, 0.0
      %v656 = vmax.f32 %v538, 0.0
      %v657 = vmax.f32 %v543, 0.0
      %v658 = vmax.f32 %v548, 0.0
      %v659 = vmax.f32 %v553, 0.0
      %v660 = vmax.f32 %v558, 0.0
      %v661 = vmax.f32 %v563, 0.0
      %v662 = vmax.f32 %v568, 0.0
      %v663 = vmax.f32 %v573, 0.0
      %v664 = vmax.f32 %v578, 0.0
      %v665 = vmax.f32 %v583, 0.0
      %v666 = vmax.f32 %v588, 0.0
      %v667 = vmax.f32 %v593, 0.0
      %v668 = vmax.f32 %v598, 0.0
      %v669 = vmax.f32 %v603, 0.0
      %v670 = vmax.f32 %v608, 0.0
      %v671 = vmax.f32 %v613, 0.0
      %v672 = vmax.f32 %v618, 0.0
      %v673 = vmax.f32 %v623, 0.0
      %v674 = vmax.f32 %v628, 0.0
      %v675 = vmax.f32 %v633, 0.0
      %v676 = vmax.f32 %v638, 0.0
      %v677 = vmax.f32 %v643, 0.0
      %v678 = vld [vmem:[%s2] sm:$0xff]
      %v679 = vld [vmem:[%s2 + $0x8] sm:$0xff]
      %v680 = vld [vmem:[%s2 + $0x10] sm:$0xff]
      %v681 = vld [vmem:[%s2 + $0x18] sm:$0xff]
      %682 = vrot.lane.b32.xlu0 %v322, 96
      %v683 = vpop.permute.xlu0 %682
      %vm685 = vcmask 261120
      %v687 = vsel %vm685, %v646, 0
      %v690 = vsel %vm685, %v647, 0
      %v693 = vsel %vm685, %v648, 0
      %v696 = vsel %vm685, %v649, 0
      %v699 = vsel %vm685, %v650, 0
      %v702 = vsel %vm685, %v651, 0
      %v705 = vsel %vm685, %v652, 0
      %v708 = vsel %vm685, %v653, 0
      %v711 = vsel %vm685, %v654, 0
      %v714 = vsel %vm685, %v655, 0
      %v717 = vsel %vm685, %v656, 0
      %v720 = vsel %vm685, %v657, 0
      %v723 = vsel %vm685, %v658, 0
      %v726 = vsel %vm685, %v659, 0
      %v729 = vsel %vm685, %v660, 0
      %v732 = vsel %vm685, %v661, 0
      %v735 = vsel %vm685, %v662, 0
      %v738 = vsel %vm685, %v663, 0
      %v741 = vsel %vm685, %v664, 0
      %v744 = vsel %vm685, %v665, 0
      %v747 = vsel %vm685, %v666, 0
      %v750 = vsel %vm685, %v667, 0
      %v753 = vsel %vm685, %v668, 0
      %v756 = vsel %vm685, %v669, 0
      %v759 = vsel %vm685, %v670, 0
      %v762 = vsel %vm685, %v671, 0
      %v765 = vsel %vm685, %v672, 0
      %v768 = vsel %vm685, %v673, 0
      %v771 = vsel %vm685, %v674, 0
      %v774 = vsel %vm685, %v675, 0
      %v777 = vsel %vm685, %v676, 0
      %v780 = vsel %vm685, %v677, 0
      %782 = vmatprep.subr.mxu0 0.0
      %783 = vmatpush1.msra.mxu0 0.0
      %784 = vmatprep.subr.mxu0 0.0
      %785 = vmatpush1.msra.mxu0 0.0
      %786 = vmatprep.subr.mxu0 0.0
      %787 = vmatpush1.msra.mxu0 0.0
      %788 = vmatprep.subr.mxu0 0.0
      %789 = vmatpush1.msra.mxu0 0.0
      %790 = vmatprep.subr.mxu0 0.0
      %791 = vmatpush1.msra.mxu0 0.0
      %792 = vmatprep.subr.mxu0 0.0
      %793 = vmatpush1.msra.mxu0 0.0
      %794 = vmatprep.subr.mxu0 0.0
      %795 = vmatpush1.msra.mxu0 0.0
      %796 = vmatprep.subr.mxu0 0.0
      %797 = vmatpush1.msra.mxu0 0.0
      %798 = vmatprep.subr.mxu0 0.0
      %799 = vmatpush1.msra.mxu0 0.0
      %800 = vmatprep.subr.mxu0 0.0
      %801 = vmatpush1.msra.mxu0 0.0
      %802 = vmatprep.subr.mxu0 0.0
      %803 = vmatpush1.msra.mxu0 0.0
      %804 = vmatprep.subr.mxu0 0.0
      %805 = vmatpush1.msra.mxu0 0.0
      %806 = vmatprep.subr.mxu0 0.0
      %807 = vmatpush1.msra.mxu0 %v681
      %808 = vmatprep.subr.mxu0 0.0
      %809 = vmatpush1.msra.mxu0 %v680
      %810 = vmatprep.subr.mxu0 0.0
      %811 = vmatpush1.msra.mxu0 %v679
      %812 = vmatprep.subr.mxu0 0.0
      %813 = vmatpush1.msra.mxu0 %v678
      %814 = vmatprep.subr.mxu0 0.0
      %815 = vmatpush2.msra.mxu0 0.0
      %816 = vmatprep.subr.mxu0 0.0
      %817 = vmatpush2.msra.mxu0 0.0
      %818 = vmatprep.subr.mxu0 0.0
      %819 = vmatpush2.msra.mxu0 0.0
      %820 = vmatprep.subr.mxu0 0.0
      %821 = vmatpush2.msra.mxu0 0.0
      %822 = vmatprep.subr.mxu0 0.0
      %823 = vmatpush2.msra.mxu0 0.0
      %824 = vmatprep.subr.mxu0 0.0
      %825 = vmatpush2.msra.mxu0 0.0
      %826 = vmatprep.subr.mxu0 0.0
      %827 = vmatpush2.msra.mxu0 0.0
      %828 = vmatprep.subr.mxu0 0.0
      %829 = vmatpush2.msra.mxu0 0.0
      %830 = vmatprep.subr.mxu0 0.0
      %831 = vmatpush2.msra.mxu0 0.0
      %832 = vmatprep.subr.mxu0 0.0
      %833 = vmatpush2.msra.mxu0 0.0
      %834 = vmatprep.subr.mxu0 0.0
      %835 = vmatpush2.msra.mxu0 0.0
      %836 = vmatprep.subr.mxu0 0.0
      %837 = vmatpush2.msra.mxu0 0.0
      %838 = vmatprep.subr.mxu0 0.0
      %839 = vmatpush2.msra.mxu0 0.0
      %840 = vmatprep.subr.mxu0 0.0
      %841 = vmatpush2.msra.mxu0 0.0
      %842 = vmatprep.subr.mxu0 0.0
      %843 = vmatpush2.msra.mxu0 0.0
      %844 = vmatprep.subr.mxu0 0.0
      %845 = vmatpush2.msra.mxu0 0.0
      %846 = vmatprep.mubr.f32.mxu0 0.0
      %847 = vmatmul.mubr.f32.gmra.mxu0 %v687
      %v848 = vpop.f32.mrf.mxu0
      %v849 = vadd.f32 %v683, %v848
      %v850 = vpop.f32.mrf.mxu0
      %851 = vmatprep.mubr.f32.mxu0 0.0
      %852 = vmatmul.mubr.f32.gmra.mxu0 %v690
      %v853 = vpop.f32.mrf.mxu0
      %v854 = vadd.f32 %v683, %v853
      %v855 = vpop.f32.mrf.mxu0
      %856 = vmatprep.mubr.f32.mxu0 0.0
      %857 = vmatmul.mubr.f32.gmra.mxu0 %v693
      %v858 = vpop.f32.mrf.mxu0
      %v859 = vadd.f32 %v683, %v858
      %v860 = vpop.f32.mrf.mxu0
      %861 = vmatprep.mubr.f32.mxu0 0.0
      %862 = vmatmul.mubr.f32.gmra.mxu0 %v696
      %v863 = vpop.f32.mrf.mxu0
      %v864 = vadd.f32 %v683, %v863
      %v865 = vpop.f32.mrf.mxu0
      %866 = vmatprep.mubr.f32.mxu0 0.0
      %867 = vmatmul.mubr.f32.gmra.mxu0 %v699
      %v868 = vpop.f32.mrf.mxu0
      %v869 = vadd.f32 %v683, %v868
      %v870 = vpop.f32.mrf.mxu0
      %871 = vmatprep.mubr.f32.mxu0 0.0
      %872 = vmatmul.mubr.f32.gmra.mxu0 %v702
      %v873 = vpop.f32.mrf.mxu0
      %v874 = vadd.f32 %v683, %v873
      %v875 = vpop.f32.mrf.mxu0
      %876 = vmatprep.mubr.f32.mxu0 0.0
      %877 = vmatmul.mubr.f32.gmra.mxu0 %v705
      %v878 = vpop.f32.mrf.mxu0
      %v879 = vadd.f32 %v683, %v878
      %v880 = vpop.f32.mrf.mxu0
      %881 = vmatprep.mubr.f32.mxu0 0.0
      %882 = vmatmul.mubr.f32.gmra.mxu0 %v708
      %v883 = vpop.f32.mrf.mxu0
      %v884 = vadd.f32 %v683, %v883
      %v885 = vpop.f32.mrf.mxu0
      %886 = vmatprep.mubr.f32.mxu0 0.0
      %887 = vmatmul.mubr.f32.gmra.mxu0 %v711
      %v888 = vpop.f32.mrf.mxu0
      %v889 = vadd.f32 %v683, %v888
      %v890 = vpop.f32.mrf.mxu0
      %891 = vmatprep.mubr.f32.mxu0 0.0
      %892 = vmatmul.mubr.f32.gmra.mxu0 %v714
      %v893 = vpop.f32.mrf.mxu0
      %v894 = vadd.f32 %v683, %v893
      %v895 = vpop.f32.mrf.mxu0
      %896 = vmatprep.mubr.f32.mxu0 0.0
      %897 = vmatmul.mubr.f32.gmra.mxu0 %v717
      %v898 = vpop.f32.mrf.mxu0
      %v899 = vadd.f32 %v683, %v898
      %v900 = vpop.f32.mrf.mxu0
      %901 = vmatprep.mubr.f32.mxu0 0.0
      %902 = vmatmul.mubr.f32.gmra.mxu0 %v720
      %v903 = vpop.f32.mrf.mxu0
      %v904 = vadd.f32 %v683, %v903
      %v905 = vpop.f32.mrf.mxu0
      %906 = vmatprep.mubr.f32.mxu0 0.0
      %907 = vmatmul.mubr.f32.gmra.mxu0 %v723
      %v908 = vpop.f32.mrf.mxu0
      %v909 = vadd.f32 %v683, %v908
      %v910 = vpop.f32.mrf.mxu0
      %911 = vmatprep.mubr.f32.mxu0 0.0
      %912 = vmatmul.mubr.f32.gmra.mxu0 %v726
      %v913 = vpop.f32.mrf.mxu0
      %v914 = vadd.f32 %v683, %v913
      %v915 = vpop.f32.mrf.mxu0
      %916 = vmatprep.mubr.f32.mxu0 0.0
      %917 = vmatmul.mubr.f32.gmra.mxu0 %v729
      %v918 = vpop.f32.mrf.mxu0
      %v919 = vadd.f32 %v683, %v918
      %v920 = vpop.f32.mrf.mxu0
      %921 = vmatprep.mubr.f32.mxu0 0.0
      %922 = vmatmul.mubr.f32.gmra.mxu0 %v732
      %v923 = vpop.f32.mrf.mxu0
      %v924 = vadd.f32 %v683, %v923
      %v925 = vpop.f32.mrf.mxu0
      %926 = vmatprep.mubr.f32.mxu0 0.0
      %927 = vmatmul.mubr.f32.gmra.mxu0 %v735
      %v928 = vpop.f32.mrf.mxu0
      %v929 = vadd.f32 %v683, %v928
      %v930 = vpop.f32.mrf.mxu0
      %931 = vmatprep.mubr.f32.mxu0 0.0
      %932 = vmatmul.mubr.f32.gmra.mxu0 %v738
      %v933 = vpop.f32.mrf.mxu0
      %v934 = vadd.f32 %v683, %v933
      %v935 = vpop.f32.mrf.mxu0
      %936 = vmatprep.mubr.f32.mxu0 0.0
      %937 = vmatmul.mubr.f32.gmra.mxu0 %v741
      %v938 = vpop.f32.mrf.mxu0
      %v939 = vadd.f32 %v683, %v938
      %v940 = vpop.f32.mrf.mxu0
      %941 = vmatprep.mubr.f32.mxu0 0.0
      %942 = vmatmul.mubr.f32.gmra.mxu0 %v744
      %v943 = vpop.f32.mrf.mxu0
      %v944 = vadd.f32 %v683, %v943
      %v945 = vpop.f32.mrf.mxu0
      %946 = vmatprep.mubr.f32.mxu0 0.0
      %947 = vmatmul.mubr.f32.gmra.mxu0 %v747
      %v948 = vpop.f32.mrf.mxu0
      %v949 = vadd.f32 %v683, %v948
      %v950 = vpop.f32.mrf.mxu0
      %951 = vmatprep.mubr.f32.mxu0 0.0
      %952 = vmatmul.mubr.f32.gmra.mxu0 %v750
      %v953 = vpop.f32.mrf.mxu0
      %v954 = vadd.f32 %v683, %v953
      %v955 = vpop.f32.mrf.mxu0
      %956 = vmatprep.mubr.f32.mxu0 0.0
      %957 = vmatmul.mubr.f32.gmra.mxu0 %v753
      %v958 = vpop.f32.mrf.mxu0
      %v959 = vadd.f32 %v683, %v958
      %v960 = vpop.f32.mrf.mxu0
      %961 = vmatprep.mubr.f32.mxu0 0.0
      %962 = vmatmul.mubr.f32.gmra.mxu0 %v756
      %v963 = vpop.f32.mrf.mxu0
      %v964 = vadd.f32 %v683, %v963
      %v965 = vpop.f32.mrf.mxu0
      %966 = vmatprep.mubr.f32.mxu0 0.0
      %967 = vmatmul.mubr.f32.gmra.mxu0 %v759
      %v968 = vpop.f32.mrf.mxu0
      %v969 = vadd.f32 %v683, %v968
      %v970 = vpop.f32.mrf.mxu0
      %971 = vmatprep.mubr.f32.mxu0 0.0
      %972 = vmatmul.mubr.f32.gmra.mxu0 %v762
      %v973 = vpop.f32.mrf.mxu0
      %v974 = vadd.f32 %v683, %v973
      %v975 = vpop.f32.mrf.mxu0
      %976 = vmatprep.mubr.f32.mxu0 0.0
      %977 = vmatmul.mubr.f32.gmra.mxu0 %v765
      %v978 = vpop.f32.mrf.mxu0
      %v979 = vadd.f32 %v683, %v978
      %v980 = vpop.f32.mrf.mxu0
      %981 = vmatprep.mubr.f32.mxu0 0.0
      %982 = vmatmul.mubr.f32.gmra.mxu0 %v768
      %v983 = vpop.f32.mrf.mxu0
      %v984 = vadd.f32 %v683, %v983
      %v985 = vpop.f32.mrf.mxu0
      %986 = vmatprep.mubr.f32.mxu0 0.0
      %987 = vmatmul.mubr.f32.gmra.mxu0 %v771
      %v988 = vpop.f32.mrf.mxu0
      %v989 = vadd.f32 %v683, %v988
      %v990 = vpop.f32.mrf.mxu0
      %991 = vmatprep.mubr.f32.mxu0 0.0
      %992 = vmatmul.mubr.f32.gmra.mxu0 %v774
      %v993 = vpop.f32.mrf.mxu0
      %v994 = vadd.f32 %v683, %v993
      %v995 = vpop.f32.mrf.mxu0
      %996 = vmatprep.mubr.f32.mxu0 0.0
      %997 = vmatmul.mubr.f32.gmra.mxu0 %v777
      %v998 = vpop.f32.mrf.mxu0
      %v999 = vadd.f32 %v683, %v998
      %v1000 = vpop.f32.mrf.mxu0
      %1001 = vmatprep.mubr.f32.mxu0 0.0
      %1002 = vmatmul.mubr.f32.gmra.mxu0 %v780
      %v1003 = vpop.f32.mrf.mxu0
      %v1004 = vadd.f32 %v683, %v1003
      %v1005 = vpop.f32.mrf.mxu0
      %1006 = vdwg.mxu0
      %v1007 = vmul.f32 %v849, %v849
      %v1008 = vmul.f32 %v854, %v854
      %v1009 = vmul.f32 %v859, %v859
      %v1010 = vmul.f32 %v864, %v864
      %v1011 = vmul.f32 %v869, %v869
      %v1012 = vmul.f32 %v874, %v874
      %v1013 = vmul.f32 %v879, %v879
      %v1014 = vmul.f32 %v884, %v884
      %v1015 = vmul.f32 %v889, %v889
      %v1016 = vmul.f32 %v894, %v894
      %v1017 = vmul.f32 %v899, %v899
      %v1018 = vmul.f32 %v904, %v904
      %v1019 = vmul.f32 %v909, %v909
      %v1020 = vmul.f32 %v914, %v914
      %v1021 = vmul.f32 %v919, %v919
      %v1022 = vmul.f32 %v924, %v924
      %v1023 = vmul.f32 %v929, %v929
      %v1024 = vmul.f32 %v934, %v934
      %v1025 = vmul.f32 %v939, %v939
      %v1026 = vmul.f32 %v944, %v944
      %v1027 = vmul.f32 %v949, %v949
      %v1028 = vmul.f32 %v954, %v954
      %v1029 = vmul.f32 %v959, %v959
      %v1030 = vmul.f32 %v964, %v964
      %v1031 = vmul.f32 %v969, %v969
      %v1032 = vmul.f32 %v974, %v974
      %v1033 = vmul.f32 %v979, %v979
      %v1034 = vmul.f32 %v984, %v984
      %v1035 = vmul.f32 %v989, %v989
      %v1036 = vmul.f32 %v994, %v994
      %v1037 = vmul.f32 %v999, %v999
      %v1038 = vmul.f32 %v1004, %v1004
      %vm1039 = vcmask 130048
      %v1040 = vsel %vm1039, %v1007, 0.0
      %1041 = vadd.xlane.f32.xlu0 %v1040
      %v1042 = vpop.xlane.xlu0 %1041
      %v1043 = vsel %vm1039, %v1008, 0.0
      %1044 = vadd.xlane.f32.xlu0 %v1043
      %v1045 = vpop.xlane.xlu0 %1044
      %v1046 = vsel %vm1039, %v1009, 0.0
      %1047 = vadd.xlane.f32.xlu0 %v1046
      %v1048 = vpop.xlane.xlu0 %1047
      %v1049 = vsel %vm1039, %v1010, 0.0
      %1050 = vadd.xlane.f32.xlu0 %v1049
      %v1051 = vpop.xlane.xlu0 %1050
      %v1052 = vsel %vm1039, %v1011, 0.0
      %1053 = vadd.xlane.f32.xlu0 %v1052
      %v1054 = vpop.xlane.xlu0 %1053
      %v1055 = vsel %vm1039, %v1012, 0.0
      %1056 = vadd.xlane.f32.xlu0 %v1055
      %v1057 = vpop.xlane.xlu0 %1056
      %v1058 = vsel %vm1039, %v1013, 0.0
      %1059 = vadd.xlane.f32.xlu0 %v1058
      %v1060 = vpop.xlane.xlu0 %1059
      %v1061 = vsel %vm1039, %v1014, 0.0
      %1062 = vadd.xlane.f32.xlu0 %v1061
      %v1063 = vpop.xlane.xlu0 %1062
      %v1064 = vsel %vm1039, %v1015, 0.0
      %1065 = vadd.xlane.f32.xlu0 %v1064
      %v1066 = vpop.xlane.xlu0 %1065
      %v1067 = vsel %vm1039, %v1016, 0.0
      %1068 = vadd.xlane.f32.xlu0 %v1067
      %v1069 = vpop.xlane.xlu0 %1068
      %v1070 = vsel %vm1039, %v1017, 0.0
      %1071 = vadd.xlane.f32.xlu0 %v1070
      %v1072 = vpop.xlane.xlu0 %1071
      %v1073 = vsel %vm1039, %v1018, 0.0
      %1074 = vadd.xlane.f32.xlu0 %v1073
      %v1075 = vpop.xlane.xlu0 %1074
      %v1076 = vsel %vm1039, %v1019, 0.0
      %1077 = vadd.xlane.f32.xlu0 %v1076
      %v1078 = vpop.xlane.xlu0 %1077
      %v1079 = vsel %vm1039, %v1020, 0.0
      %1080 = vadd.xlane.f32.xlu0 %v1079
      %v1081 = vpop.xlane.xlu0 %1080
      %v1082 = vsel %vm1039, %v1021, 0.0
      %1083 = vadd.xlane.f32.xlu0 %v1082
      %v1084 = vpop.xlane.xlu0 %1083
      %v1085 = vsel %vm1039, %v1022, 0.0
      %1086 = vadd.xlane.f32.xlu0 %v1085
      %v1087 = vpop.xlane.xlu0 %1086
      %v1088 = vsel %vm1039, %v1023, 0.0
      %1089 = vadd.xlane.f32.xlu0 %v1088
      %v1090 = vpop.xlane.xlu0 %1089
      %v1091 = vsel %vm1039, %v1024, 0.0
      %1092 = vadd.xlane.f32.xlu0 %v1091
      %v1093 = vpop.xlane.xlu0 %1092
      %v1094 = vsel %vm1039, %v1025, 0.0
      %1095 = vadd.xlane.f32.xlu0 %v1094
      %v1096 = vpop.xlane.xlu0 %1095
      %v1097 = vsel %vm1039, %v1026, 0.0
      %1098 = vadd.xlane.f32.xlu0 %v1097
      %v1099 = vpop.xlane.xlu0 %1098
      %v1100 = vsel %vm1039, %v1027, 0.0
      %1101 = vadd.xlane.f32.xlu0 %v1100
      %v1102 = vpop.xlane.xlu0 %1101
      %v1103 = vsel %vm1039, %v1028, 0.0
      %1104 = vadd.xlane.f32.xlu0 %v1103
      %v1105 = vpop.xlane.xlu0 %1104
      %v1106 = vsel %vm1039, %v1029, 0.0
      %1107 = vadd.xlane.f32.xlu0 %v1106
      %v1108 = vpop.xlane.xlu0 %1107
      %v1109 = vsel %vm1039, %v1030, 0.0
      %1110 = vadd.xlane.f32.xlu0 %v1109
      %v1111 = vpop.xlane.xlu0 %1110
      %v1112 = vsel %vm1039, %v1031, 0.0
      %1113 = vadd.xlane.f32.xlu0 %v1112
      %v1114 = vpop.xlane.xlu0 %1113
      %v1115 = vsel %vm1039, %v1032, 0.0
      %1116 = vadd.xlane.f32.xlu0 %v1115
      %v1117 = vpop.xlane.xlu0 %1116
      %v1118 = vsel %vm1039, %v1033, 0.0
      %1119 = vadd.xlane.f32.xlu0 %v1118
      %v1120 = vpop.xlane.xlu0 %1119
      %v1121 = vsel %vm1039, %v1034, 0.0
      %1122 = vadd.xlane.f32.xlu0 %v1121
      %v1123 = vpop.xlane.xlu0 %1122
      %v1124 = vsel %vm1039, %v1035, 0.0
      %1125 = vadd.xlane.f32.xlu0 %v1124
      %v1126 = vpop.xlane.xlu0 %1125
      %v1127 = vsel %vm1039, %v1036, 0.0
      %1128 = vadd.xlane.f32.xlu0 %v1127
      %v1129 = vpop.xlane.xlu0 %1128
      %v1130 = vsel %vm1039, %v1037, 0.0
      %1131 = vadd.xlane.f32.xlu0 %v1130
      %v1132 = vpop.xlane.xlu0 %1131
      %v1133 = vsel %vm1039, %v1038, 0.0
      %1134 = vadd.xlane.f32.xlu0 %v1133
      %v1135 = vpop.xlane.xlu0 %1134
      %v1136 = vrsqrt.pop %v1042
      %v1137 = vrsqrt.pop %v1045
      %v1138 = vrsqrt.pop %v1048
      %v1139 = vrsqrt.pop %v1051
      %v1140 = vrsqrt.pop %v1054
      %v1141 = vrsqrt.pop %v1057
      %v1142 = vrsqrt.pop %v1060
      %v1143 = vrsqrt.pop %v1063
      %v1144 = vrsqrt.pop %v1066
      %v1145 = vrsqrt.pop %v1069
      %v1146 = vrsqrt.pop %v1072
      %v1147 = vrsqrt.pop %v1075
      %v1148 = vrsqrt.pop %v1078
      %v1149 = vrsqrt.pop %v1081
      %v1150 = vrsqrt.pop %v1084
      %v1151 = vrsqrt.pop %v1087
      %v1152 = vrsqrt.pop %v1090
      %v1153 = vrsqrt.pop %v1093
      %v1154 = vrsqrt.pop %v1096
      %v1155 = vrsqrt.pop %v1099
      %v1156 = vrsqrt.pop %v1102
      %v1157 = vrsqrt.pop %v1105
      %v1158 = vrsqrt.pop %v1108
      %v1159 = vrsqrt.pop %v1111
      %v1160 = vrsqrt.pop %v1114
      %v1161 = vrsqrt.pop %v1117
      %v1162 = vrsqrt.pop %v1120
      %v1163 = vrsqrt.pop %v1123
      %v1164 = vrsqrt.pop %v1126
      %v1165 = vrsqrt.pop %v1129
      %v1166 = vrsqrt.pop %v1132
      %v1167 = vrsqrt.pop %v1135
      %v1168 = vmul.f32 %v1042, 0.5
      %v1169 = vmul.f32 %v1045, 0.5
      %v1170 = vmul.f32 %v1048, 0.5
      %v1171 = vmul.f32 %v1051, 0.5
      %v1172 = vmul.f32 %v1054, 0.5
      %v1173 = vmul.f32 %v1057, 0.5
      %v1174 = vmul.f32 %v1060, 0.5
      %v1175 = vmul.f32 %v1063, 0.5
      %v1176 = vmul.f32 %v1066, 0.5
      %v1177 = vmul.f32 %v1069, 0.5
      %v1178 = vmul.f32 %v1072, 0.5
      %v1179 = vmul.f32 %v1075, 0.5
      %v1180 = vmul.f32 %v1078, 0.5
      %v1181 = vmul.f32 %v1081, 0.5
      %v1182 = vmul.f32 %v1084, 0.5
      %v1183 = vmul.f32 %v1087, 0.5
      %v1184 = vmul.f32 %v1090, 0.5
      %v1185 = vmul.f32 %v1093, 0.5
      %v1186 = vmul.f32 %v1096, 0.5
      %v1187 = vmul.f32 %v1099, 0.5
      %v1188 = vmul.f32 %v1102, 0.5
      %v1189 = vmul.f32 %v1105, 0.5
      %v1190 = vmul.f32 %v1108, 0.5
      %v1191 = vmul.f32 %v1111, 0.5
      %v1192 = vmul.f32 %v1114, 0.5
      %v1193 = vmul.f32 %v1117, 0.5
      %v1194 = vmul.f32 %v1120, 0.5
      %v1195 = vmul.f32 %v1123, 0.5
      %v1196 = vmul.f32 %v1126, 0.5
      %v1197 = vmul.f32 %v1129, 0.5
      %v1198 = vmul.f32 %v1132, 0.5
      %v1199 = vmul.f32 %v1135, 0.5
      %v1200 = vmul.f32 %v1168, %v1136
      %v1201 = vmul.f32 %v1169, %v1137
      %v1202 = vmul.f32 %v1170, %v1138
      %v1203 = vmul.f32 %v1171, %v1139
      %v1204 = vmul.f32 %v1172, %v1140
      %v1205 = vmul.f32 %v1173, %v1141
      %v1206 = vmul.f32 %v1174, %v1142
      %v1207 = vmul.f32 %v1175, %v1143
      %v1208 = vmul.f32 %v1176, %v1144
      %v1209 = vmul.f32 %v1177, %v1145
      %v1210 = vmul.f32 %v1178, %v1146
      %v1211 = vmul.f32 %v1179, %v1147
      %v1212 = vmul.f32 %v1180, %v1148
      %v1213 = vmul.f32 %v1181, %v1149
      %v1214 = vmul.f32 %v1182, %v1150
      %v1215 = vmul.f32 %v1183, %v1151
      %v1216 = vmul.f32 %v1184, %v1152
      %v1217 = vmul.f32 %v1185, %v1153
      %v1218 = vmul.f32 %v1186, %v1154
      %v1219 = vmul.f32 %v1187, %v1155
      %v1220 = vmul.f32 %v1188, %v1156
      %v1221 = vmul.f32 %v1189, %v1157
      %v1222 = vmul.f32 %v1190, %v1158
      %v1223 = vmul.f32 %v1191, %v1159
      %v1224 = vmul.f32 %v1192, %v1160
      %v1225 = vmul.f32 %v1193, %v1161
      %v1226 = vmul.f32 %v1194, %v1162
      %v1227 = vmul.f32 %v1195, %v1163
      %v1228 = vmul.f32 %v1196, %v1164
      %v1229 = vmul.f32 %v1197, %v1165
      %v1230 = vmul.f32 %v1198, %v1166
      %v1231 = vmul.f32 %v1199, %v1167
      %v1232 = vmul.f32 %v1200, %v1136
      %v1233 = vmul.f32 %v1201, %v1137
      %v1234 = vmul.f32 %v1202, %v1138
      %v1235 = vmul.f32 %v1203, %v1139
      %v1236 = vmul.f32 %v1204, %v1140
      %v1237 = vmul.f32 %v1205, %v1141
      %v1238 = vmul.f32 %v1206, %v1142
      %v1239 = vmul.f32 %v1207, %v1143
      %v1240 = vmul.f32 %v1208, %v1144
      %v1241 = vmul.f32 %v1209, %v1145
      %v1242 = vmul.f32 %v1210, %v1146
      %v1243 = vmul.f32 %v1211, %v1147
      %v1244 = vmul.f32 %v1212, %v1148
      %v1245 = vmul.f32 %v1213, %v1149
      %v1246 = vmul.f32 %v1214, %v1150
      %v1247 = vmul.f32 %v1215, %v1151
      %v1248 = vmul.f32 %v1216, %v1152
      %v1249 = vmul.f32 %v1217, %v1153
      %v1250 = vmul.f32 %v1218, %v1154
      %v1251 = vmul.f32 %v1219, %v1155
      %v1252 = vmul.f32 %v1220, %v1156
      %v1253 = vmul.f32 %v1221, %v1157
      %v1254 = vmul.f32 %v1222, %v1158
      %v1255 = vmul.f32 %v1223, %v1159
      %v1256 = vmul.f32 %v1224, %v1160
      %v1257 = vmul.f32 %v1225, %v1161
      %v1258 = vmul.f32 %v1226, %v1162
      %v1259 = vmul.f32 %v1227, %v1163
      %v1260 = vmul.f32 %v1228, %v1164
      %v1261 = vmul.f32 %v1229, %v1165
      %v1262 = vmul.f32 %v1230, %v1166
      %v1263 = vmul.f32 %v1231, %v1167
      %v1264 = vsub.f32 1.5, %v1232
      %v1265 = vsub.f32 1.5, %v1233
      %v1266 = vsub.f32 1.5, %v1234
      %v1267 = vsub.f32 1.5, %v1235
      %v1268 = vsub.f32 1.5, %v1236
      %v1269 = vsub.f32 1.5, %v1237
      %v1270 = vsub.f32 1.5, %v1238
      %v1271 = vsub.f32 1.5, %v1239
      %v1272 = vsub.f32 1.5, %v1240
      %v1273 = vsub.f32 1.5, %v1241
      %v1274 = vsub.f32 1.5, %v1242
      %v1275 = vsub.f32 1.5, %v1243
      %v1276 = vsub.f32 1.5, %v1244
      %v1277 = vsub.f32 1.5, %v1245
      %v1278 = vsub.f32 1.5, %v1246
      %v1279 = vsub.f32 1.5, %v1247
      %v1280 = vsub.f32 1.5, %v1248
      %v1281 = vsub.f32 1.5, %v1249
      %v1282 = vsub.f32 1.5, %v1250
      %v1283 = vsub.f32 1.5, %v1251
      %v1284 = vsub.f32 1.5, %v1252
      %v1285 = vsub.f32 1.5, %v1253
      %v1286 = vsub.f32 1.5, %v1254
      %v1287 = vsub.f32 1.5, %v1255
      %v1288 = vsub.f32 1.5, %v1256
      %v1289 = vsub.f32 1.5, %v1257
      %v1290 = vsub.f32 1.5, %v1258
      %v1291 = vsub.f32 1.5, %v1259
      %v1292 = vsub.f32 1.5, %v1260
      %v1293 = vsub.f32 1.5, %v1261
      %v1294 = vsub.f32 1.5, %v1262
      %v1295 = vsub.f32 1.5, %v1263
      %v1296 = vmul.f32 %v1136, %v1264
      %v1297 = vmul.f32 %v1137, %v1265
      %v1298 = vmul.f32 %v1138, %v1266
      %v1299 = vmul.f32 %v1139, %v1267
      %v1300 = vmul.f32 %v1140, %v1268
      %v1301 = vmul.f32 %v1141, %v1269
      %v1302 = vmul.f32 %v1142, %v1270
      %v1303 = vmul.f32 %v1143, %v1271
      %v1304 = vmul.f32 %v1144, %v1272
      %v1305 = vmul.f32 %v1145, %v1273
      %v1306 = vmul.f32 %v1146, %v1274
      %v1307 = vmul.f32 %v1147, %v1275
      %v1308 = vmul.f32 %v1148, %v1276
      %v1309 = vmul.f32 %v1149, %v1277
      %v1310 = vmul.f32 %v1150, %v1278
      %v1311 = vmul.f32 %v1151, %v1279
      %v1312 = vmul.f32 %v1152, %v1280
      %v1313 = vmul.f32 %v1153, %v1281
      %v1314 = vmul.f32 %v1154, %v1282
      %v1315 = vmul.f32 %v1155, %v1283
      %v1316 = vmul.f32 %v1156, %v1284
      %v1317 = vmul.f32 %v1157, %v1285
      %v1318 = vmul.f32 %v1158, %v1286
      %v1319 = vmul.f32 %v1159, %v1287
      %v1320 = vmul.f32 %v1160, %v1288
      %v1321 = vmul.f32 %v1161, %v1289
      %v1322 = vmul.f32 %v1162, %v1290
      %v1323 = vmul.f32 %v1163, %v1291
      %v1324 = vmul.f32 %v1164, %v1292
      %v1325 = vmul.f32 %v1165, %v1293
      %v1326 = vmul.f32 %v1166, %v1294
      %v1327 = vmul.f32 %v1167, %v1295
      %v1328 = vmul.f32 %v849, %v1296
      %v1329 = vmul.f32 %v854, %v1297
      %v1330 = vmul.f32 %v859, %v1298
      %v1331 = vmul.f32 %v864, %v1299
      %v1332 = vmul.f32 %v869, %v1300
      %v1333 = vmul.f32 %v874, %v1301
      %v1334 = vmul.f32 %v879, %v1302
      %v1335 = vmul.f32 %v884, %v1303
      %v1336 = vmul.f32 %v889, %v1304
      %v1337 = vmul.f32 %v894, %v1305
      %v1338 = vmul.f32 %v899, %v1306
      %v1339 = vmul.f32 %v904, %v1307
      %v1340 = vmul.f32 %v909, %v1308
      %v1341 = vmul.f32 %v914, %v1309
      %v1342 = vmul.f32 %v919, %v1310
      %v1343 = vmul.f32 %v924, %v1311
      %v1344 = vmul.f32 %v929, %v1312
      %v1345 = vmul.f32 %v934, %v1313
      %v1346 = vmul.f32 %v939, %v1314
      %v1347 = vmul.f32 %v944, %v1315
      %v1348 = vmul.f32 %v949, %v1316
      %v1349 = vmul.f32 %v954, %v1317
      %v1350 = vmul.f32 %v959, %v1318
      %v1351 = vmul.f32 %v964, %v1319
      %v1352 = vmul.f32 %v969, %v1320
      %v1353 = vmul.f32 %v974, %v1321
      %v1354 = vmul.f32 %v979, %v1322
      %v1355 = vmul.f32 %v984, %v1323
      %v1356 = vmul.f32 %v989, %v1324
      %v1357 = vmul.f32 %v994, %v1325
      %v1358 = vmul.f32 %v999, %v1326
      %v1359 = vmul.f32 %v1004, %v1327
      %v1360 = vld [vmem:[%s3] sm:$0xff]
      %v1361 = vld [vmem:[%s3 + $0x8] sm:$0xff]
      %v1362 = vld [vmem:[%s4] sm:$0xff]
      %1363 = vrot.lane.b32.xlu0 %v282, 112
      %v1364 = vpop.permute.xlu0 %1363
      %1365 = vrot.lane.b32.xlu0 %v283, 112
      %v1366 = vpop.permute.xlu0 %1365
      %1367 = vrot.lane.b32.xlu0 %v284, 112
      %v1368 = vpop.permute.xlu0 %1367
      %1369 = vrot.lane.b32.xlu0 %v285, 112
      %v1370 = vpop.permute.xlu0 %1369
      %1371 = vrot.lane.b32.xlu0 %v286, 112
      %v1372 = vpop.permute.xlu0 %1371
      %1373 = vrot.lane.b32.xlu0 %v287, 112
      %v1374 = vpop.permute.xlu0 %1373
      %1375 = vrot.lane.b32.xlu0 %v288, 112
      %v1376 = vpop.permute.xlu0 %1375
      %1377 = vrot.lane.b32.xlu0 %v289, 112
      %v1378 = vpop.permute.xlu0 %1377
      %1379 = vrot.lane.b32.xlu0 %v290, 112
      %v1380 = vpop.permute.xlu0 %1379
      %1381 = vrot.lane.b32.xlu0 %v291, 112
      %v1382 = vpop.permute.xlu0 %1381
      %1383 = vrot.lane.b32.xlu0 %v292, 112
      %v1384 = vpop.permute.xlu0 %1383
      %1385 = vrot.lane.b32.xlu0 %v293, 112
      %v1386 = vpop.permute.xlu0 %1385
      %1387 = vrot.lane.b32.xlu0 %v294, 112
      %v1388 = vpop.permute.xlu0 %1387
      %1389 = vrot.lane.b32.xlu0 %v295, 112
      %v1390 = vpop.permute.xlu0 %1389
      %1391 = vrot.lane.b32.xlu0 %v296, 112
      %v1392 = vpop.permute.xlu0 %1391
      %1393 = vrot.lane.b32.xlu0 %v297, 112
      %v1394 = vpop.permute.xlu0 %1393
      %1395 = vrot.lane.b32.xlu0 %v298, 112
      %v1396 = vpop.permute.xlu0 %1395
      %1397 = vrot.lane.b32.xlu0 %v299, 112
      %v1398 = vpop.permute.xlu0 %1397
      %1399 = vrot.lane.b32.xlu0 %v300, 112
      %v1400 = vpop.permute.xlu0 %1399
      %1401 = vrot.lane.b32.xlu0 %v301, 112
      %v1402 = vpop.permute.xlu0 %1401
      %1403 = vrot.lane.b32.xlu0 %v302, 112
      %v1404 = vpop.permute.xlu0 %1403
      %1405 = vrot.lane.b32.xlu0 %v303, 112
      %v1406 = vpop.permute.xlu0 %1405
      %1407 = vrot.lane.b32.xlu0 %v304, 112
      %v1408 = vpop.permute.xlu0 %1407
      %1409 = vrot.lane.b32.xlu0 %v305, 112
      %v1410 = vpop.permute.xlu0 %1409
      %1411 = vrot.lane.b32.xlu0 %v306, 112
      %v1412 = vpop.permute.xlu0 %1411
      %1413 = vrot.lane.b32.xlu0 %v307, 112
      %v1414 = vpop.permute.xlu0 %1413
      %1415 = vrot.lane.b32.xlu0 %v308, 112
      %v1416 = vpop.permute.xlu0 %1415
      %1417 = vrot.lane.b32.xlu0 %v309, 112
      %v1418 = vpop.permute.xlu0 %1417
      %1419 = vrot.lane.b32.xlu0 %v310, 112
      %v1420 = vpop.permute.xlu0 %1419
      %1421 = vrot.lane.b32.xlu0 %v311, 112
      %v1422 = vpop.permute.xlu0 %1421
      %1423 = vrot.lane.b32.xlu0 %v312, 112
      %v1424 = vpop.permute.xlu0 %1423
      %1425 = vrot.lane.b32.xlu0 %v313, 112
      %v1426 = vpop.permute.xlu0 %1425
      %vm1427 = vcmask 64512
      %v1428 = vsel %vm1427, %v1364, 0
      %v1430 = vsel %vm1427, %v1366, 0
      %v1432 = vsel %vm1427, %v1368, 0
      %v1434 = vsel %vm1427, %v1370, 0
      %v1436 = vsel %vm1427, %v1372, 0
      %v1438 = vsel %vm1427, %v1374, 0
      %v1440 = vsel %vm1427, %v1376, 0
      %v1442 = vsel %vm1427, %v1378, 0
      %v1444 = vsel %vm1427, %v1380, 0
      %v1446 = vsel %vm1427, %v1382, 0
      %v1448 = vsel %vm1427, %v1384, 0
      %v1450 = vsel %vm1427, %v1386, 0
      %v1452 = vsel %vm1427, %v1388, 0
      %v1454 = vsel %vm1427, %v1390, 0
      %v1456 = vsel %vm1427, %v1392, 0
      %v1458 = vsel %vm1427, %v1394, 0
      %v1460 = vsel %vm1427, %v1396, 0
      %v1462 = vsel %vm1427, %v1398, 0
      %v1464 = vsel %vm1427, %v1400, 0
      %v1466 = vsel %vm1427, %v1402, 0
      %v1468 = vsel %vm1427, %v1404, 0
      %v1470 = vsel %vm1427, %v1406, 0
      %v1472 = vsel %vm1427, %v1408, 0
      %v1474 = vsel %vm1427, %v1410, 0
      %v1476 = vsel %vm1427, %v1412, 0
      %v1478 = vsel %vm1427, %v1414, 0
      %v1480 = vsel %vm1427, %v1416, 0
      %v1482 = vsel %vm1427, %v1418, 0
      %v1484 = vsel %vm1427, %v1420, 0
      %v1486 = vsel %vm1427, %v1422, 0
      %v1488 = vsel %vm1427, %v1424, 0
      %v1490 = vsel %vm1427, %v1426, 0
      %1492 = vmatprep.subr.mxu0 0.0
      %1493 = vmatpush1.msra.mxu0 0.0
      %1494 = vmatprep.subr.mxu0 0.0
      %1495 = vmatpush1.msra.mxu0 0.0
      %1496 = vmatprep.subr.mxu0 0.0
      %1497 = vmatpush1.msra.mxu0 0.0
      %1498 = vmatprep.subr.mxu0 0.0
      %1499 = vmatpush1.msra.mxu0 0.0
      %1500 = vmatprep.subr.mxu0 0.0
      %1501 = vmatpush1.msra.mxu0 0.0
      %1502 = vmatprep.subr.mxu0 0.0
      %1503 = vmatpush1.msra.mxu0 0.0
      %1504 = vmatprep.subr.mxu0 0.0
      %1505 = vmatpush1.msra.mxu0 0.0
      %1506 = vmatprep.subr.mxu0 0.0
      %1507 = vmatpush1.msra.mxu0 0.0
      %1508 = vmatprep.subr.mxu0 0.0
      %1509 = vmatpush1.msra.mxu0 0.0
      %1510 = vmatprep.subr.mxu0 0.0
      %1511 = vmatpush1.msra.mxu0 0.0
      %1512 = vmatprep.subr.mxu0 0.0
      %1513 = vmatpush1.msra.mxu0 0.0
      %1514 = vmatprep.subr.mxu0 0.0
      %1515 = vmatpush1.msra.mxu0 0.0
      %1516 = vmatprep.subr.mxu0 0.0
      %1517 = vmatpush1.msra.mxu0 0.0
      %1518 = vmatprep.subr.mxu0 0.0
      %1519 = vmatpush1.msra.mxu0 0.0
      %1520 = vmatprep.subr.mxu0 0.0
      %1521 = vmatpush1.msra.mxu0 0.0
      %1522 = vmatprep.subr.mxu0 0.0
      %1523 = vmatpush1.msra.mxu0 %v1362
      %1524 = vmatprep.subr.mxu0 0.0
      %1525 = vmatpush2.msra.mxu0 0.0
      %1526 = vmatprep.subr.mxu0 0.0
      %1527 = vmatpush2.msra.mxu0 0.0
      %1528 = vmatprep.subr.mxu0 0.0
      %1529 = vmatpush2.msra.mxu0 0.0
      %1530 = vmatprep.subr.mxu0 0.0
      %1531 = vmatpush2.msra.mxu0 0.0
      %1532 = vmatprep.subr.mxu0 0.0
      %1533 = vmatpush2.msra.mxu0 0.0
      %1534 = vmatprep.subr.mxu0 0.0
      %1535 = vmatpush2.msra.mxu0 0.0
      %1536 = vmatprep.subr.mxu0 0.0
      %1537 = vmatpush2.msra.mxu0 0.0
      %1538 = vmatprep.subr.mxu0 0.0
      %1539 = vmatpush2.msra.mxu0 0.0
      %1540 = vmatprep.subr.mxu0 0.0
      %1541 = vmatpush2.msra.mxu0 0.0
      %1542 = vmatprep.subr.mxu0 0.0
      %1543 = vmatpush2.msra.mxu0 0.0
      %1544 = vmatprep.subr.mxu0 0.0
      %1545 = vmatpush2.msra.mxu0 0.0
      %1546 = vmatprep.subr.mxu0 0.0
      %1547 = vmatpush2.msra.mxu0 0.0
      %1548 = vmatprep.subr.mxu0 0.0
      %1549 = vmatpush2.msra.mxu0 0.0
      %1550 = vmatprep.subr.mxu0 0.0
      %1551 = vmatpush2.msra.mxu0 0.0
      %1552 = vmatprep.subr.mxu0 0.0
      %1553 = vmatpush2.msra.mxu0 0.0
      %1554 = vmatprep.subr.mxu0 0.0
      %1555 = vmatpush2.msra.mxu0 0.0
      %1556 = vmatprep.mubr.f32.mxu0 0.0
      %1557 = vmatmul.mubr.f32.gmra.mxu0 %v1428
      %v1558 = vpop.f32.mrf.mxu0
      %v1559 = vadd.f32 0.0, %v1558
      %v1560 = vpop.f32.mrf.mxu0
      %1561 = vmatprep.mubr.f32.mxu0 0.0
      %1562 = vmatmul.mubr.f32.gmra.mxu0 %v1430
      %v1563 = vpop.f32.mrf.mxu0
      %v1564 = vadd.f32 0.0, %v1563
      %v1565 = vpop.f32.mrf.mxu0
      %1566 = vmatprep.mubr.f32.mxu0 0.0
      %1567 = vmatmul.mubr.f32.gmra.mxu0 %v1432
      %v1568 = vpop.f32.mrf.mxu0
      %v1569 = vadd.f32 0.0, %v1568
      %v1570 = vpop.f32.mrf.mxu0
      %1571 = vmatprep.mubr.f32.mxu0 0.0
      %1572 = vmatmul.mubr.f32.gmra.mxu0 %v1434
      %v1573 = vpop.f32.mrf.mxu0
      %v1574 = vadd.f32 0.0, %v1573
      %v1575 = vpop.f32.mrf.mxu0
      %1576 = vmatprep.mubr.f32.mxu0 0.0
      %1577 = vmatmul.mubr.f32.gmra.mxu0 %v1436
      %v1578 = vpop.f32.mrf.mxu0
      %v1579 = vadd.f32 0.0, %v1578
      %v1580 = vpop.f32.mrf.mxu0
      %1581 = vmatprep.mubr.f32.mxu0 0.0
      %1582 = vmatmul.mubr.f32.gmra.mxu0 %v1438
      %v1583 = vpop.f32.mrf.mxu0
      %v1584 = vadd.f32 0.0, %v1583
      %v1585 = vpop.f32.mrf.mxu0
      %1586 = vmatprep.mubr.f32.mxu0 0.0
      %1587 = vmatmul.mubr.f32.gmra.mxu0 %v1440
      %v1588 = vpop.f32.mrf.mxu0
      %v1589 = vadd.f32 0.0, %v1588
      %v1590 = vpop.f32.mrf.mxu0
      %1591 = vmatprep.mubr.f32.mxu0 0.0
      %1592 = vmatmul.mubr.f32.gmra.mxu0 %v1442
      %v1593 = vpop.f32.mrf.mxu0
      %v1594 = vadd.f32 0.0, %v1593
      %v1595 = vpop.f32.mrf.mxu0
      %1596 = vmatprep.mubr.f32.mxu0 0.0
      %1597 = vmatmul.mubr.f32.gmra.mxu0 %v1444
      %v1598 = vpop.f32.mrf.mxu0
      %v1599 = vadd.f32 0.0, %v1598
      %v1600 = vpop.f32.mrf.mxu0
      %1601 = vmatprep.mubr.f32.mxu0 0.0
      %1602 = vmatmul.mubr.f32.gmra.mxu0 %v1446
      %v1603 = vpop.f32.mrf.mxu0
      %v1604 = vadd.f32 0.0, %v1603
      %v1605 = vpop.f32.mrf.mxu0
      %1606 = vmatprep.mubr.f32.mxu0 0.0
      %1607 = vmatmul.mubr.f32.gmra.mxu0 %v1448
      %v1608 = vpop.f32.mrf.mxu0
      %v1609 = vadd.f32 0.0, %v1608
      %v1610 = vpop.f32.mrf.mxu0
      %1611 = vmatprep.mubr.f32.mxu0 0.0
      %1612 = vmatmul.mubr.f32.gmra.mxu0 %v1450
      %v1613 = vpop.f32.mrf.mxu0
      %v1614 = vadd.f32 0.0, %v1613
      %v1615 = vpop.f32.mrf.mxu0
      %1616 = vmatprep.mubr.f32.mxu0 0.0
      %1617 = vmatmul.mubr.f32.gmra.mxu0 %v1452
      %v1618 = vpop.f32.mrf.mxu0
      %v1619 = vadd.f32 0.0, %v1618
      %v1620 = vpop.f32.mrf.mxu0
      %1621 = vmatprep.mubr.f32.mxu0 0.0
      %1622 = vmatmul.mubr.f32.gmra.mxu0 %v1454
      %v1623 = vpop.f32.mrf.mxu0
      %v1624 = vadd.f32 0.0, %v1623
      %v1625 = vpop.f32.mrf.mxu0
      %1626 = vmatprep.mubr.f32.mxu0 0.0
      %1627 = vmatmul.mubr.f32.gmra.mxu0 %v1456
      %v1628 = vpop.f32.mrf.mxu0
      %v1629 = vadd.f32 0.0, %v1628
      %v1630 = vpop.f32.mrf.mxu0
      %1631 = vmatprep.mubr.f32.mxu0 0.0
      %1632 = vmatmul.mubr.f32.gmra.mxu0 %v1458
      %v1633 = vpop.f32.mrf.mxu0
      %v1634 = vadd.f32 0.0, %v1633
      %v1635 = vpop.f32.mrf.mxu0
      %1636 = vmatprep.mubr.f32.mxu0 0.0
      %1637 = vmatmul.mubr.f32.gmra.mxu0 %v1460
      %v1638 = vpop.f32.mrf.mxu0
      %v1639 = vadd.f32 0.0, %v1638
      %v1640 = vpop.f32.mrf.mxu0
      %1641 = vmatprep.mubr.f32.mxu0 0.0
      %1642 = vmatmul.mubr.f32.gmra.mxu0 %v1462
      %v1643 = vpop.f32.mrf.mxu0
      %v1644 = vadd.f32 0.0, %v1643
      %v1645 = vpop.f32.mrf.mxu0
      %1646 = vmatprep.mubr.f32.mxu0 0.0
      %1647 = vmatmul.mubr.f32.gmra.mxu0 %v1464
      %v1648 = vpop.f32.mrf.mxu0
      %v1649 = vadd.f32 0.0, %v1648
      %v1650 = vpop.f32.mrf.mxu0
      %1651 = vmatprep.mubr.f32.mxu0 0.0
      %1652 = vmatmul.mubr.f32.gmra.mxu0 %v1466
      %v1653 = vpop.f32.mrf.mxu0
      %v1654 = vadd.f32 0.0, %v1653
      %v1655 = vpop.f32.mrf.mxu0
      %1656 = vmatprep.mubr.f32.mxu0 0.0
      %1657 = vmatmul.mubr.f32.gmra.mxu0 %v1468
      %v1658 = vpop.f32.mrf.mxu0
      %v1659 = vadd.f32 0.0, %v1658
      %v1660 = vpop.f32.mrf.mxu0
      %1661 = vmatprep.mubr.f32.mxu0 0.0
      %1662 = vmatmul.mubr.f32.gmra.mxu0 %v1470
      %v1663 = vpop.f32.mrf.mxu0
      %v1664 = vadd.f32 0.0, %v1663
      %v1665 = vpop.f32.mrf.mxu0
      %1666 = vmatprep.mubr.f32.mxu0 0.0
      %1667 = vmatmul.mubr.f32.gmra.mxu0 %v1472
      %v1668 = vpop.f32.mrf.mxu0
      %v1669 = vadd.f32 0.0, %v1668
      %v1670 = vpop.f32.mrf.mxu0
      %1671 = vmatprep.mubr.f32.mxu0 0.0
      %1672 = vmatmul.mubr.f32.gmra.mxu0 %v1474
      %v1673 = vpop.f32.mrf.mxu0
      %v1674 = vadd.f32 0.0, %v1673
      %v1675 = vpop.f32.mrf.mxu0
      %1676 = vmatprep.mubr.f32.mxu0 0.0
      %1677 = vmatmul.mubr.f32.gmra.mxu0 %v1476
      %v1678 = vpop.f32.mrf.mxu0
      %v1679 = vadd.f32 0.0, %v1678
      %v1680 = vpop.f32.mrf.mxu0
      %1681 = vmatprep.mubr.f32.mxu0 0.0
      %1682 = vmatmul.mubr.f32.gmra.mxu0 %v1478
      %v1683 = vpop.f32.mrf.mxu0
      %v1684 = vadd.f32 0.0, %v1683
      %v1685 = vpop.f32.mrf.mxu0
      %1686 = vmatprep.mubr.f32.mxu0 0.0
      %1687 = vmatmul.mubr.f32.gmra.mxu0 %v1480
      %v1688 = vpop.f32.mrf.mxu0
      %v1689 = vadd.f32 0.0, %v1688
      %v1690 = vpop.f32.mrf.mxu0
      %1691 = vmatprep.mubr.f32.mxu0 0.0
      %1692 = vmatmul.mubr.f32.gmra.mxu0 %v1482
      %v1693 = vpop.f32.mrf.mxu0
      %v1694 = vadd.f32 0.0, %v1693
      %v1695 = vpop.f32.mrf.mxu0
      %1696 = vmatprep.mubr.f32.mxu0 0.0
      %1697 = vmatmul.mubr.f32.gmra.mxu0 %v1484
      %v1698 = vpop.f32.mrf.mxu0
      %v1699 = vadd.f32 0.0, %v1698
      %v1700 = vpop.f32.mrf.mxu0
      %1701 = vmatprep.mubr.f32.mxu0 0.0
      %1702 = vmatmul.mubr.f32.gmra.mxu0 %v1486
      %v1703 = vpop.f32.mrf.mxu0
      %v1704 = vadd.f32 0.0, %v1703
      %v1705 = vpop.f32.mrf.mxu0
      %1706 = vmatprep.mubr.f32.mxu0 0.0
      %1707 = vmatmul.mubr.f32.gmra.mxu0 %v1488
      %v1708 = vpop.f32.mrf.mxu0
      %v1709 = vadd.f32 0.0, %v1708
      %v1710 = vpop.f32.mrf.mxu0
      %1711 = vmatprep.mubr.f32.mxu0 0.0
      %1712 = vmatmul.mubr.f32.gmra.mxu0 %v1490
      %v1713 = vpop.f32.mrf.mxu0
      %v1714 = vadd.f32 0.0, %v1713
      %v1715 = vpop.f32.mrf.mxu0
      %1716 = vdwg.mxu0
      %v1718 = vsel %vm1039, %v1328, 0
      %v1721 = vsel %vm1039, %v1329, 0
      %v1724 = vsel %vm1039, %v1330, 0
      %v1727 = vsel %vm1039, %v1331, 0
      %v1730 = vsel %vm1039, %v1332, 0
      %v1733 = vsel %vm1039, %v1333, 0
      %v1736 = vsel %vm1039, %v1334, 0
      %v1739 = vsel %vm1039, %v1335, 0
      %v1742 = vsel %vm1039, %v1336, 0
      %v1745 = vsel %vm1039, %v1337, 0
      %v1748 = vsel %vm1039, %v1338, 0
      %v1751 = vsel %vm1039, %v1339, 0
      %v1754 = vsel %vm1039, %v1340, 0
      %v1757 = vsel %vm1039, %v1341, 0
      %v1760 = vsel %vm1039, %v1342, 0
      %v1763 = vsel %vm1039, %v1343, 0
      %v1766 = vsel %vm1039, %v1344, 0
      %v1769 = vsel %vm1039, %v1345, 0
      %v1772 = vsel %vm1039, %v1346, 0
      %v1775 = vsel %vm1039, %v1347, 0
      %v1778 = vsel %vm1039, %v1348, 0
      %v1781 = vsel %vm1039, %v1349, 0
      %v1784 = vsel %vm1039, %v1350, 0
      %v1787 = vsel %vm1039, %v1351, 0
      %v1790 = vsel %vm1039, %v1352, 0
      %v1793 = vsel %vm1039, %v1353, 0
      %v1796 = vsel %vm1039, %v1354, 0
      %v1799 = vsel %vm1039, %v1355, 0
      %v1802 = vsel %vm1039, %v1356, 0
      %v1805 = vsel %vm1039, %v1357, 0
      %v1808 = vsel %vm1039, %v1358, 0
      %v1811 = vsel %vm1039, %v1359, 0
      %1813 = vmatprep.subr.mxu0 0.0
      %1814 = vmatpush1.msra.mxu0 0.0
      %1815 = vmatprep.subr.mxu0 0.0
      %1816 = vmatpush1.msra.mxu0 0.0
      %1817 = vmatprep.subr.mxu0 0.0
      %1818 = vmatpush1.msra.mxu0 0.0
      %1819 = vmatprep.subr.mxu0 0.0
      %1820 = vmatpush1.msra.mxu0 0.0
      %1821 = vmatprep.subr.mxu0 0.0
      %1822 = vmatpush1.msra.mxu0 0.0
      %1823 = vmatprep.subr.mxu0 0.0
      %1824 = vmatpush1.msra.mxu0 0.0
      %1825 = vmatprep.subr.mxu0 0.0
      %1826 = vmatpush1.msra.mxu0 0.0
      %1827 = vmatprep.subr.mxu0 0.0
      %1828 = vmatpush1.msra.mxu0 0.0
      %1829 = vmatprep.subr.mxu0 0.0
      %1830 = vmatpush1.msra.mxu0 0.0
      %1831 = vmatprep.subr.mxu0 0.0
      %1832 = vmatpush1.msra.mxu0 0.0
      %1833 = vmatprep.subr.mxu0 0.0
      %1834 = vmatpush1.msra.mxu0 0.0
      %1835 = vmatprep.subr.mxu0 0.0
      %1836 = vmatpush1.msra.mxu0 0.0
      %1837 = vmatprep.subr.mxu0 0.0
      %1838 = vmatpush1.msra.mxu0 0.0
      %1839 = vmatprep.subr.mxu0 0.0
      %1840 = vmatpush1.msra.mxu0 0.0
      %1841 = vmatprep.subr.mxu0 0.0
      %1842 = vmatpush1.msra.mxu0 %v1361
      %1843 = vmatprep.subr.mxu0 0.0
      %1844 = vmatpush1.msra.mxu0 %v1360
      %1845 = vmatprep.subr.mxu0 0.0
      %1846 = vmatpush2.msra.mxu0 0.0
      %1847 = vmatprep.subr.mxu0 0.0
      %1848 = vmatpush2.msra.mxu0 0.0
      %1849 = vmatprep.subr.mxu0 0.0
      %1850 = vmatpush2.msra.mxu0 0.0
      %1851 = vmatprep.subr.mxu0 0.0
      %1852 = vmatpush2.msra.mxu0 0.0
      %1853 = vmatprep.subr.mxu0 0.0
      %1854 = vmatpush2.msra.mxu0 0.0
      %1855 = vmatprep.subr.mxu0 0.0
      %1856 = vmatpush2.msra.mxu0 0.0
      %1857 = vmatprep.subr.mxu0 0.0
      %1858 = vmatpush2.msra.mxu0 0.0
      %1859 = vmatprep.subr.mxu0 0.0
      %1860 = vmatpush2.msra.mxu0 0.0
      %1861 = vmatprep.subr.mxu0 0.0
      %1862 = vmatpush2.msra.mxu0 0.0
      %1863 = vmatprep.subr.mxu0 0.0
      %1864 = vmatpush2.msra.mxu0 0.0
      %1865 = vmatprep.subr.mxu0 0.0
      %1866 = vmatpush2.msra.mxu0 0.0
      %1867 = vmatprep.subr.mxu0 0.0
      %1868 = vmatpush2.msra.mxu0 0.0
      %1869 = vmatprep.subr.mxu0 0.0
      %1870 = vmatpush2.msra.mxu0 0.0
      %1871 = vmatprep.subr.mxu0 0.0
      %1872 = vmatpush2.msra.mxu0 0.0
      %1873 = vmatprep.subr.mxu0 0.0
      %1874 = vmatpush2.msra.mxu0 0.0
      %1875 = vmatprep.subr.mxu0 0.0
      %1876 = vmatpush2.msra.mxu0 0.0
      %1877 = vmatprep.mubr.f32.mxu0 0.0
      %1878 = vmatmul.mubr.f32.gmra.mxu0 %v1718
      %v1879 = vpop.f32.mrf.mxu0
      %v1880 = vadd.f32 %v1559, %v1879
      %v1881 = vpop.f32.mrf.mxu0
      %1882 = vmatprep.mubr.f32.mxu0 0.0
      %1883 = vmatmul.mubr.f32.gmra.mxu0 %v1721
      %v1884 = vpop.f32.mrf.mxu0
      %v1885 = vadd.f32 %v1564, %v1884
      %v1886 = vpop.f32.mrf.mxu0
      %1887 = vmatprep.mubr.f32.mxu0 0.0
      %1888 = vmatmul.mubr.f32.gmra.mxu0 %v1724
      %v1889 = vpop.f32.mrf.mxu0
      %v1890 = vadd.f32 %v1569, %v1889
      %v1891 = vpop.f32.mrf.mxu0
      %1892 = vmatprep.mubr.f32.mxu0 0.0
      %1893 = vmatmul.mubr.f32.gmra.mxu0 %v1727
      %v1894 = vpop.f32.mrf.mxu0
      %v1895 = vadd.f32 %v1574, %v1894
      %v1896 = vpop.f32.mrf.mxu0
      %1897 = vmatprep.mubr.f32.mxu0 0.0
      %1898 = vmatmul.mubr.f32.gmra.mxu0 %v1730
      %v1899 = vpop.f32.mrf.mxu0
      %v1900 = vadd.f32 %v1579, %v1899
      %v1901 = vpop.f32.mrf.mxu0
      %1902 = vmatprep.mubr.f32.mxu0 0.0
      %1903 = vmatmul.mubr.f32.gmra.mxu0 %v1733
      %v1904 = vpop.f32.mrf.mxu0
      %v1905 = vadd.f32 %v1584, %v1904
      %v1906 = vpop.f32.mrf.mxu0
      %1907 = vmatprep.mubr.f32.mxu0 0.0
      %1908 = vmatmul.mubr.f32.gmra.mxu0 %v1736
      %v1909 = vpop.f32.mrf.mxu0
      %v1910 = vadd.f32 %v1589, %v1909
      %v1911 = vpop.f32.mrf.mxu0
      %1912 = vmatprep.mubr.f32.mxu0 0.0
      %1913 = vmatmul.mubr.f32.gmra.mxu0 %v1739
      %v1914 = vpop.f32.mrf.mxu0
      %v1915 = vadd.f32 %v1594, %v1914
      %v1916 = vpop.f32.mrf.mxu0
      %1917 = vmatprep.mubr.f32.mxu0 0.0
      %1918 = vmatmul.mubr.f32.gmra.mxu0 %v1742
      %v1919 = vpop.f32.mrf.mxu0
      %v1920 = vadd.f32 %v1599, %v1919
      %v1921 = vpop.f32.mrf.mxu0
      %1922 = vmatprep.mubr.f32.mxu0 0.0
      %1923 = vmatmul.mubr.f32.gmra.mxu0 %v1745
      %v1924 = vpop.f32.mrf.mxu0
      %v1925 = vadd.f32 %v1604, %v1924
      %v1926 = vpop.f32.mrf.mxu0
      %1927 = vmatprep.mubr.f32.mxu0 0.0
      %1928 = vmatmul.mubr.f32.gmra.mxu0 %v1748
      %v1929 = vpop.f32.mrf.mxu0
      %v1930 = vadd.f32 %v1609, %v1929
      %v1931 = vpop.f32.mrf.mxu0
      %1932 = vmatprep.mubr.f32.mxu0 0.0
      %1933 = vmatmul.mubr.f32.gmra.mxu0 %v1751
      %v1934 = vpop.f32.mrf.mxu0
      %v1935 = vadd.f32 %v1614, %v1934
      %v1936 = vpop.f32.mrf.mxu0
      %1937 = vmatprep.mubr.f32.mxu0 0.0
      %1938 = vmatmul.mubr.f32.gmra.mxu0 %v1754
      %v1939 = vpop.f32.mrf.mxu0
      %v1940 = vadd.f32 %v1619, %v1939
      %v1941 = vpop.f32.mrf.mxu0
      %1942 = vmatprep.mubr.f32.mxu0 0.0
      %1943 = vmatmul.mubr.f32.gmra.mxu0 %v1757
      %v1944 = vpop.f32.mrf.mxu0
      %v1945 = vadd.f32 %v1624, %v1944
      %v1946 = vpop.f32.mrf.mxu0
      %1947 = vmatprep.mubr.f32.mxu0 0.0
      %1948 = vmatmul.mubr.f32.gmra.mxu0 %v1760
      %v1949 = vpop.f32.mrf.mxu0
      %v1950 = vadd.f32 %v1629, %v1949
      %v1951 = vpop.f32.mrf.mxu0
      %1952 = vmatprep.mubr.f32.mxu0 0.0
      %1953 = vmatmul.mubr.f32.gmra.mxu0 %v1763
      %v1954 = vpop.f32.mrf.mxu0
      %v1955 = vadd.f32 %v1634, %v1954
      %v1956 = vpop.f32.mrf.mxu0
      %1957 = vmatprep.mubr.f32.mxu0 0.0
      %1958 = vmatmul.mubr.f32.gmra.mxu0 %v1766
      %v1959 = vpop.f32.mrf.mxu0
      %v1960 = vadd.f32 %v1639, %v1959
      %v1961 = vpop.f32.mrf.mxu0
      %1962 = vmatprep.mubr.f32.mxu0 0.0
      %1963 = vmatmul.mubr.f32.gmra.mxu0 %v1769
      %v1964 = vpop.f32.mrf.mxu0
      %v1965 = vadd.f32 %v1644, %v1964
      %v1966 = vpop.f32.mrf.mxu0
      %1967 = vmatprep.mubr.f32.mxu0 0.0
      %1968 = vmatmul.mubr.f32.gmra.mxu0 %v1772
      %v1969 = vpop.f32.mrf.mxu0
      %v1970 = vadd.f32 %v1649, %v1969
      %v1971 = vpop.f32.mrf.mxu0
      %1972 = vmatprep.mubr.f32.mxu0 0.0
      %1973 = vmatmul.mubr.f32.gmra.mxu0 %v1775
      %v1974 = vpop.f32.mrf.mxu0
      %v1975 = vadd.f32 %v1654, %v1974
      %v1976 = vpop.f32.mrf.mxu0
      %1977 = vmatprep.mubr.f32.mxu0 0.0
      %1978 = vmatmul.mubr.f32.gmra.mxu0 %v1778
      %v1979 = vpop.f32.mrf.mxu0
      %v1980 = vadd.f32 %v1659, %v1979
      %v1981 = vpop.f32.mrf.mxu0
      %1982 = vmatprep.mubr.f32.mxu0 0.0
      %1983 = vmatmul.mubr.f32.gmra.mxu0 %v1781
      %v1984 = vpop.f32.mrf.mxu0
      %v1985 = vadd.f32 %v1664, %v1984
      %v1986 = vpop.f32.mrf.mxu0
      %1987 = vmatprep.mubr.f32.mxu0 0.0
      %1988 = vmatmul.mubr.f32.gmra.mxu0 %v1784
      %v1989 = vpop.f32.mrf.mxu0
      %v1990 = vadd.f32 %v1669, %v1989
      %v1991 = vpop.f32.mrf.mxu0
      %1992 = vmatprep.mubr.f32.mxu0 0.0
      %1993 = vmatmul.mubr.f32.gmra.mxu0 %v1787
      %v1994 = vpop.f32.mrf.mxu0
      %v1995 = vadd.f32 %v1674, %v1994
      %v1996 = vpop.f32.mrf.mxu0
      %1997 = vmatprep.mubr.f32.mxu0 0.0
      %1998 = vmatmul.mubr.f32.gmra.mxu0 %v1790
      %v1999 = vpop.f32.mrf.mxu0
      %v2000 = vadd.f32 %v1679, %v1999
      %v2001 = vpop.f32.mrf.mxu0
      %2002 = vmatprep.mubr.f32.mxu0 0.0
      %2003 = vmatmul.mubr.f32.gmra.mxu0 %v1793
      %v2004 = vpop.f32.mrf.mxu0
      %v2005 = vadd.f32 %v1684, %v2004
      %v2006 = vpop.f32.mrf.mxu0
      %2007 = vmatprep.mubr.f32.mxu0 0.0
      %2008 = vmatmul.mubr.f32.gmra.mxu0 %v1796
      %v2009 = vpop.f32.mrf.mxu0
      %v2010 = vadd.f32 %v1689, %v2009
      %v2011 = vpop.f32.mrf.mxu0
      %2012 = vmatprep.mubr.f32.mxu0 0.0
      %2013 = vmatmul.mubr.f32.gmra.mxu0 %v1799
      %v2014 = vpop.f32.mrf.mxu0
      %v2015 = vadd.f32 %v1694, %v2014
      %v2016 = vpop.f32.mrf.mxu0
      %2017 = vmatprep.mubr.f32.mxu0 0.0
      %2018 = vmatmul.mubr.f32.gmra.mxu0 %v1802
      %v2019 = vpop.f32.mrf.mxu0
      %v2020 = vadd.f32 %v1699, %v2019
      %v2021 = vpop.f32.mrf.mxu0
      %2022 = vmatprep.mubr.f32.mxu0 0.0
      %2023 = vmatmul.mubr.f32.gmra.mxu0 %v1805
      %v2024 = vpop.f32.mrf.mxu0
      %v2025 = vadd.f32 %v1704, %v2024
      %v2026 = vpop.f32.mrf.mxu0
      %2027 = vmatprep.mubr.f32.mxu0 0.0
      %2028 = vmatmul.mubr.f32.gmra.mxu0 %v1808
      %v2029 = vpop.f32.mrf.mxu0
      %v2030 = vadd.f32 %v1709, %v2029
      %v2031 = vpop.f32.mrf.mxu0
      %2032 = vmatprep.mubr.f32.mxu0 0.0
      %2033 = vmatmul.mubr.f32.gmra.mxu0 %v1811
      %v2034 = vpop.f32.mrf.mxu0
      %v2035 = vadd.f32 %v1714, %v2034
      %v2036 = vpop.f32.mrf.mxu0
      %2037 = vdwg.mxu0
      %2038 = vrot.lane.b32.xlu0 %v322, 80
      %v2039 = vpop.permute.xlu0 %2038
      %v2041 = vadd.f32 %v1880, %v2039
      %v2042 = vadd.f32 %v1885, %v2039
      %v2043 = vadd.f32 %v1890, %v2039
      %v2044 = vadd.f32 %v1895, %v2039
      %v2045 = vadd.f32 %v1900, %v2039
      %v2046 = vadd.f32 %v1905, %v2039
      %v2047 = vadd.f32 %v1910, %v2039
      %v2048 = vadd.f32 %v1915, %v2039
      %v2049 = vadd.f32 %v1920, %v2039
      %v2050 = vadd.f32 %v1925, %v2039
      %v2051 = vadd.f32 %v1930, %v2039
      %v2052 = vadd.f32 %v1935, %v2039
      %v2053 = vadd.f32 %v1940, %v2039
      %v2054 = vadd.f32 %v1945, %v2039
      %v2055 = vadd.f32 %v1950, %v2039
      %v2056 = vadd.f32 %v1955, %v2039
      %v2057 = vadd.f32 %v1960, %v2039
      %v2058 = vadd.f32 %v1965, %v2039
      %v2059 = vadd.f32 %v1970, %v2039
      %v2060 = vadd.f32 %v1975, %v2039
      %v2061 = vadd.f32 %v1980, %v2039
      %v2062 = vadd.f32 %v1985, %v2039
      %v2063 = vadd.f32 %v1990, %v2039
      %v2064 = vadd.f32 %v1995, %v2039
      %v2065 = vadd.f32 %v2000, %v2039
      %v2066 = vadd.f32 %v2005, %v2039
      %v2067 = vadd.f32 %v2010, %v2039
      %v2068 = vadd.f32 %v2015, %v2039
      %v2069 = vadd.f32 %v2020, %v2039
      %v2070 = vadd.f32 %v2025, %v2039
      %v2071 = vadd.f32 %v2030, %v2039
      %v2072 = vadd.f32 %v2035, %v2039
      %v2073 = vmax.f32 %v2041, 0.0
      %v2074 = vmax.f32 %v2042, 0.0
      %v2075 = vmax.f32 %v2043, 0.0
      %v2076 = vmax.f32 %v2044, 0.0
      %v2077 = vmax.f32 %v2045, 0.0
      %v2078 = vmax.f32 %v2046, 0.0
      %v2079 = vmax.f32 %v2047, 0.0
      %v2080 = vmax.f32 %v2048, 0.0
      %v2081 = vmax.f32 %v2049, 0.0
      %v2082 = vmax.f32 %v2050, 0.0
      %v2083 = vmax.f32 %v2051, 0.0
      %v2084 = vmax.f32 %v2052, 0.0
      %v2085 = vmax.f32 %v2053, 0.0
      %v2086 = vmax.f32 %v2054, 0.0
      %v2087 = vmax.f32 %v2055, 0.0
      %v2088 = vmax.f32 %v2056, 0.0
      %v2089 = vmax.f32 %v2057, 0.0
      %v2090 = vmax.f32 %v2058, 0.0
      %v2091 = vmax.f32 %v2059, 0.0
      %v2092 = vmax.f32 %v2060, 0.0
      %v2093 = vmax.f32 %v2061, 0.0
      %v2094 = vmax.f32 %v2062, 0.0
      %v2095 = vmax.f32 %v2063, 0.0
      %v2096 = vmax.f32 %v2064, 0.0
      %v2097 = vmax.f32 %v2065, 0.0
      %v2098 = vmax.f32 %v2066, 0.0
      %v2099 = vmax.f32 %v2067, 0.0
      %v2100 = vmax.f32 %v2068, 0.0
      %v2101 = vmax.f32 %v2069, 0.0
      %v2102 = vmax.f32 %v2070, 0.0
      %v2103 = vmax.f32 %v2071, 0.0
      %v2104 = vmax.f32 %v2072, 0.0
      %v2105 = vld [vmem:[%s5] sm:$0xff]
      %v2106 = vld [vmem:[%s5 + $0x8] sm:$0xff]
      %v2107 = vld [vmem:[%s5 + $0x10] sm:$0xff]
      %v2108 = vld [vmem:[%s5 + $0x18] sm:$0xff]
      %2109 = vrot.lane.b32.xlu0 %v322, 48
      %v2110 = vpop.permute.xlu0 %2109
      %v2113 = vsel %vm685, %v2073, 0
      %v2116 = vsel %vm685, %v2074, 0
      %v2119 = vsel %vm685, %v2075, 0
      %v2122 = vsel %vm685, %v2076, 0
      %v2125 = vsel %vm685, %v2077, 0
      %v2128 = vsel %vm685, %v2078, 0
      %v2131 = vsel %vm685, %v2079, 0
      %v2134 = vsel %vm685, %v2080, 0
      %v2137 = vsel %vm685, %v2081, 0
      %v2140 = vsel %vm685, %v2082, 0
      %v2143 = vsel %vm685, %v2083, 0
      %v2146 = vsel %vm685, %v2084, 0
      %v2149 = vsel %vm685, %v2085, 0
      %v2152 = vsel %vm685, %v2086, 0
      %v2155 = vsel %vm685, %v2087, 0
      %v2158 = vsel %vm685, %v2088, 0
      %v2161 = vsel %vm685, %v2089, 0
      %v2164 = vsel %vm685, %v2090, 0
      %v2167 = vsel %vm685, %v2091, 0
      %v2170 = vsel %vm685, %v2092, 0
      %v2173 = vsel %vm685, %v2093, 0
      %v2176 = vsel %vm685, %v2094, 0
      %v2179 = vsel %vm685, %v2095, 0
      %v2182 = vsel %vm685, %v2096, 0
      %v2185 = vsel %vm685, %v2097, 0
      %v2188 = vsel %vm685, %v2098, 0
      %v2191 = vsel %vm685, %v2099, 0
      %v2194 = vsel %vm685, %v2100, 0
      %v2197 = vsel %vm685, %v2101, 0
      %v2200 = vsel %vm685, %v2102, 0
      %v2203 = vsel %vm685, %v2103, 0
      %v2206 = vsel %vm685, %v2104, 0
      %2208 = vmatprep.subr.mxu0 0.0
      %2209 = vmatpush1.msra.mxu0 0.0
      %2210 = vmatprep.subr.mxu0 0.0
      %2211 = vmatpush1.msra.mxu0 0.0
      %2212 = vmatprep.subr.mxu0 0.0
      %2213 = vmatpush1.msra.mxu0 0.0
      %2214 = vmatprep.subr.mxu0 0.0
      %2215 = vmatpush1.msra.mxu0 0.0
      %2216 = vmatprep.subr.mxu0 0.0
      %2217 = vmatpush1.msra.mxu0 0.0
      %2218 = vmatprep.subr.mxu0 0.0
      %2219 = vmatpush1.msra.mxu0 0.0
      %2220 = vmatprep.subr.mxu0 0.0
      %2221 = vmatpush1.msra.mxu0 0.0
      %2222 = vmatprep.subr.mxu0 0.0
      %2223 = vmatpush1.msra.mxu0 0.0
      %2224 = vmatprep.subr.mxu0 0.0
      %2225 = vmatpush1.msra.mxu0 0.0
      %2226 = vmatprep.subr.mxu0 0.0
      %2227 = vmatpush1.msra.mxu0 0.0
      %2228 = vmatprep.subr.mxu0 0.0
      %2229 = vmatpush1.msra.mxu0 0.0
      %2230 = vmatprep.subr.mxu0 0.0
      %2231 = vmatpush1.msra.mxu0 0.0
      %2232 = vmatprep.subr.mxu0 0.0
      %2233 = vmatpush1.msra.mxu0 %v2108
      %2234 = vmatprep.subr.mxu0 0.0
      %2235 = vmatpush1.msra.mxu0 %v2107
      %2236 = vmatprep.subr.mxu0 0.0
      %2237 = vmatpush1.msra.mxu0 %v2106
      %2238 = vmatprep.subr.mxu0 0.0
      %2239 = vmatpush1.msra.mxu0 %v2105
      %2240 = vmatprep.subr.mxu0 0.0
      %2241 = vmatpush2.msra.mxu0 0.0
      %2242 = vmatprep.subr.mxu0 0.0
      %2243 = vmatpush2.msra.mxu0 0.0
      %2244 = vmatprep.subr.mxu0 0.0
      %2245 = vmatpush2.msra.mxu0 0.0
      %2246 = vmatprep.subr.mxu0 0.0
      %2247 = vmatpush2.msra.mxu0 0.0
      %2248 = vmatprep.subr.mxu0 0.0
      %2249 = vmatpush2.msra.mxu0 0.0
      %2250 = vmatprep.subr.mxu0 0.0
      %2251 = vmatpush2.msra.mxu0 0.0
      %2252 = vmatprep.subr.mxu0 0.0
      %2253 = vmatpush2.msra.mxu0 0.0
      %2254 = vmatprep.subr.mxu0 0.0
      %2255 = vmatpush2.msra.mxu0 0.0
      %2256 = vmatprep.subr.mxu0 0.0
      %2257 = vmatpush2.msra.mxu0 0.0
      %2258 = vmatprep.subr.mxu0 0.0
      %2259 = vmatpush2.msra.mxu0 0.0
      %2260 = vmatprep.subr.mxu0 0.0
      %2261 = vmatpush2.msra.mxu0 0.0
      %2262 = vmatprep.subr.mxu0 0.0
      %2263 = vmatpush2.msra.mxu0 0.0
      %2264 = vmatprep.subr.mxu0 0.0
      %2265 = vmatpush2.msra.mxu0 0.0
      %2266 = vmatprep.subr.mxu0 0.0
      %2267 = vmatpush2.msra.mxu0 0.0
      %2268 = vmatprep.subr.mxu0 0.0
      %2269 = vmatpush2.msra.mxu0 0.0
      %2270 = vmatprep.subr.mxu0 0.0
      %2271 = vmatpush2.msra.mxu0 0.0
      %2272 = vmatprep.mubr.f32.mxu0 0.0
      %2273 = vmatmul.mubr.f32.gmra.mxu0 %v2113
      %v2274 = vpop.f32.mrf.mxu0
      %v2275 = vadd.f32 %v2110, %v2274
      %v2276 = vpop.f32.mrf.mxu0
      %2277 = vmatprep.mubr.f32.mxu0 0.0
      %2278 = vmatmul.mubr.f32.gmra.mxu0 %v2116
      %v2279 = vpop.f32.mrf.mxu0
      %v2280 = vadd.f32 %v2110, %v2279
      %v2281 = vpop.f32.mrf.mxu0
      %2282 = vmatprep.mubr.f32.mxu0 0.0
      %2283 = vmatmul.mubr.f32.gmra.mxu0 %v2119
      %v2284 = vpop.f32.mrf.mxu0
      %v2285 = vadd.f32 %v2110, %v2284
      %v2286 = vpop.f32.mrf.mxu0
      %2287 = vmatprep.mubr.f32.mxu0 0.0
      %2288 = vmatmul.mubr.f32.gmra.mxu0 %v2122
      %v2289 = vpop.f32.mrf.mxu0
      %v2290 = vadd.f32 %v2110, %v2289
      %v2291 = vpop.f32.mrf.mxu0
      %2292 = vmatprep.mubr.f32.mxu0 0.0
      %2293 = vmatmul.mubr.f32.gmra.mxu0 %v2125
      %v2294 = vpop.f32.mrf.mxu0
      %v2295 = vadd.f32 %v2110, %v2294
      %v2296 = vpop.f32.mrf.mxu0
      %2297 = vmatprep.mubr.f32.mxu0 0.0
      %2298 = vmatmul.mubr.f32.gmra.mxu0 %v2128
      %v2299 = vpop.f32.mrf.mxu0
      %v2300 = vadd.f32 %v2110, %v2299
      %v2301 = vpop.f32.mrf.mxu0
      %2302 = vmatprep.mubr.f32.mxu0 0.0
      %2303 = vmatmul.mubr.f32.gmra.mxu0 %v2131
      %v2304 = vpop.f32.mrf.mxu0
      %v2305 = vadd.f32 %v2110, %v2304
      %v2306 = vpop.f32.mrf.mxu0
      %2307 = vmatprep.mubr.f32.mxu0 0.0
      %2308 = vmatmul.mubr.f32.gmra.mxu0 %v2134
      %v2309 = vpop.f32.mrf.mxu0
      %v2310 = vadd.f32 %v2110, %v2309
      %v2311 = vpop.f32.mrf.mxu0
      %2312 = vmatprep.mubr.f32.mxu0 0.0
      %2313 = vmatmul.mubr.f32.gmra.mxu0 %v2137
      %v2314 = vpop.f32.mrf.mxu0
      %v2315 = vadd.f32 %v2110, %v2314
      %v2316 = vpop.f32.mrf.mxu0
      %2317 = vmatprep.mubr.f32.mxu0 0.0
      %2318 = vmatmul.mubr.f32.gmra.mxu0 %v2140
      %v2319 = vpop.f32.mrf.mxu0
      %v2320 = vadd.f32 %v2110, %v2319
      %v2321 = vpop.f32.mrf.mxu0
      %2322 = vmatprep.mubr.f32.mxu0 0.0
      %2323 = vmatmul.mubr.f32.gmra.mxu0 %v2143
      %v2324 = vpop.f32.mrf.mxu0
      %v2325 = vadd.f32 %v2110, %v2324
      %v2326 = vpop.f32.mrf.mxu0
      %2327 = vmatprep.mubr.f32.mxu0 0.0
      %2328 = vmatmul.mubr.f32.gmra.mxu0 %v2146
      %v2329 = vpop.f32.mrf.mxu0
      %v2330 = vadd.f32 %v2110, %v2329
      %v2331 = vpop.f32.mrf.mxu0
      %2332 = vmatprep.mubr.f32.mxu0 0.0
      %2333 = vmatmul.mubr.f32.gmra.mxu0 %v2149
      %v2334 = vpop.f32.mrf.mxu0
      %v2335 = vadd.f32 %v2110, %v2334
      %v2336 = vpop.f32.mrf.mxu0
      %2337 = vmatprep.mubr.f32.mxu0 0.0
      %2338 = vmatmul.mubr.f32.gmra.mxu0 %v2152
      %v2339 = vpop.f32.mrf.mxu0
      %v2340 = vadd.f32 %v2110, %v2339
      %v2341 = vpop.f32.mrf.mxu0
      %2342 = vmatprep.mubr.f32.mxu0 0.0
      %2343 = vmatmul.mubr.f32.gmra.mxu0 %v2155
      %v2344 = vpop.f32.mrf.mxu0
      %v2345 = vadd.f32 %v2110, %v2344
      %v2346 = vpop.f32.mrf.mxu0
      %2347 = vmatprep.mubr.f32.mxu0 0.0
      %2348 = vmatmul.mubr.f32.gmra.mxu0 %v2158
      %v2349 = vpop.f32.mrf.mxu0
      %v2350 = vadd.f32 %v2110, %v2349
      %v2351 = vpop.f32.mrf.mxu0
      %2352 = vmatprep.mubr.f32.mxu0 0.0
      %2353 = vmatmul.mubr.f32.gmra.mxu0 %v2161
      %v2354 = vpop.f32.mrf.mxu0
      %v2355 = vadd.f32 %v2110, %v2354
      %v2356 = vpop.f32.mrf.mxu0
      %2357 = vmatprep.mubr.f32.mxu0 0.0
      %2358 = vmatmul.mubr.f32.gmra.mxu0 %v2164
      %v2359 = vpop.f32.mrf.mxu0
      %v2360 = vadd.f32 %v2110, %v2359
      %v2361 = vpop.f32.mrf.mxu0
      %2362 = vmatprep.mubr.f32.mxu0 0.0
      %2363 = vmatmul.mubr.f32.gmra.mxu0 %v2167
      %v2364 = vpop.f32.mrf.mxu0
      %v2365 = vadd.f32 %v2110, %v2364
      %v2366 = vpop.f32.mrf.mxu0
      %2367 = vmatprep.mubr.f32.mxu0 0.0
      %2368 = vmatmul.mubr.f32.gmra.mxu0 %v2170
      %v2369 = vpop.f32.mrf.mxu0
      %v2370 = vadd.f32 %v2110, %v2369
      %v2371 = vpop.f32.mrf.mxu0
      %2372 = vmatprep.mubr.f32.mxu0 0.0
      %2373 = vmatmul.mubr.f32.gmra.mxu0 %v2173
      %v2374 = vpop.f32.mrf.mxu0
      %v2375 = vadd.f32 %v2110, %v2374
      %v2376 = vpop.f32.mrf.mxu0
      %2377 = vmatprep.mubr.f32.mxu0 0.0
      %2378 = vmatmul.mubr.f32.gmra.mxu0 %v2176
      %v2379 = vpop.f32.mrf.mxu0
      %v2380 = vadd.f32 %v2110, %v2379
      %v2381 = vpop.f32.mrf.mxu0
      %2382 = vmatprep.mubr.f32.mxu0 0.0
      %2383 = vmatmul.mubr.f32.gmra.mxu0 %v2179
      %v2384 = vpop.f32.mrf.mxu0
      %v2385 = vadd.f32 %v2110, %v2384
      %v2386 = vpop.f32.mrf.mxu0
      %2387 = vmatprep.mubr.f32.mxu0 0.0
      %2388 = vmatmul.mubr.f32.gmra.mxu0 %v2182
      %v2389 = vpop.f32.mrf.mxu0
      %v2390 = vadd.f32 %v2110, %v2389
      %v2391 = vpop.f32.mrf.mxu0
      %2392 = vmatprep.mubr.f32.mxu0 0.0
      %2393 = vmatmul.mubr.f32.gmra.mxu0 %v2185
      %v2394 = vpop.f32.mrf.mxu0
      %v2395 = vadd.f32 %v2110, %v2394
      %v2396 = vpop.f32.mrf.mxu0
      %2397 = vmatprep.mubr.f32.mxu0 0.0
      %2398 = vmatmul.mubr.f32.gmra.mxu0 %v2188
      %v2399 = vpop.f32.mrf.mxu0
      %v2400 = vadd.f32 %v2110, %v2399
      %v2401 = vpop.f32.mrf.mxu0
      %2402 = vmatprep.mubr.f32.mxu0 0.0
      %2403 = vmatmul.mubr.f32.gmra.mxu0 %v2191
      %v2404 = vpop.f32.mrf.mxu0
      %v2405 = vadd.f32 %v2110, %v2404
      %v2406 = vpop.f32.mrf.mxu0
      %2407 = vmatprep.mubr.f32.mxu0 0.0
      %2408 = vmatmul.mubr.f32.gmra.mxu0 %v2194
      %v2409 = vpop.f32.mrf.mxu0
      %v2410 = vadd.f32 %v2110, %v2409
      %v2411 = vpop.f32.mrf.mxu0
      %2412 = vmatprep.mubr.f32.mxu0 0.0
      %2413 = vmatmul.mubr.f32.gmra.mxu0 %v2197
      %v2414 = vpop.f32.mrf.mxu0
      %v2415 = vadd.f32 %v2110, %v2414
      %v2416 = vpop.f32.mrf.mxu0
      %2417 = vmatprep.mubr.f32.mxu0 0.0
      %2418 = vmatmul.mubr.f32.gmra.mxu0 %v2200
      %v2419 = vpop.f32.mrf.mxu0
      %v2420 = vadd.f32 %v2110, %v2419
      %v2421 = vpop.f32.mrf.mxu0
      %2422 = vmatprep.mubr.f32.mxu0 0.0
      %2423 = vmatmul.mubr.f32.gmra.mxu0 %v2203
      %v2424 = vpop.f32.mrf.mxu0
      %v2425 = vadd.f32 %v2110, %v2424
      %v2426 = vpop.f32.mrf.mxu0
      %2427 = vmatprep.mubr.f32.mxu0 0.0
      %2428 = vmatmul.mubr.f32.gmra.mxu0 %v2206
      %v2429 = vpop.f32.mrf.mxu0
      %v2430 = vadd.f32 %v2110, %v2429
      %v2431 = vpop.f32.mrf.mxu0
      %2432 = vdwg.mxu0
      %2433 = vrot.lane.b32.xlu0 %v1328, 16
      %v2434 = vpop.permute.xlu0 %2433
      %2435 = vrot.lane.b32.xlu0 %v1329, 16
      %v2436 = vpop.permute.xlu0 %2435
      %2437 = vrot.lane.b32.xlu0 %v1330, 16
      %v2438 = vpop.permute.xlu0 %2437
      %2439 = vrot.lane.b32.xlu0 %v1331, 16
      %v2440 = vpop.permute.xlu0 %2439
      %2441 = vrot.lane.b32.xlu0 %v1332, 16
      %v2442 = vpop.permute.xlu0 %2441
      %2443 = vrot.lane.b32.xlu0 %v1333, 16
      %v2444 = vpop.permute.xlu0 %2443
      %2445 = vrot.lane.b32.xlu0 %v1334, 16
      %v2446 = vpop.permute.xlu0 %2445
      %2447 = vrot.lane.b32.xlu0 %v1335, 16
      %v2448 = vpop.permute.xlu0 %2447
      %2449 = vrot.lane.b32.xlu0 %v1336, 16
      %v2450 = vpop.permute.xlu0 %2449
      %2451 = vrot.lane.b32.xlu0 %v1337, 16
      %v2452 = vpop.permute.xlu0 %2451
      %2453 = vrot.lane.b32.xlu0 %v1338, 16
      %v2454 = vpop.permute.xlu0 %2453
      %2455 = vrot.lane.b32.xlu0 %v1339, 16
      %v2456 = vpop.permute.xlu0 %2455
      %2457 = vrot.lane.b32.xlu0 %v1340, 16
      %v2458 = vpop.permute.xlu0 %2457
      %2459 = vrot.lane.b32.xlu0 %v1341, 16
      %v2460 = vpop.permute.xlu0 %2459
      %2461 = vrot.lane.b32.xlu0 %v1342, 16
      %v2462 = vpop.permute.xlu0 %2461
      %2463 = vrot.lane.b32.xlu0 %v1343, 16
      %v2464 = vpop.permute.xlu0 %2463
      %2465 = vrot.lane.b32.xlu0 %v1344, 16
      %v2466 = vpop.permute.xlu0 %2465
      %2467 = vrot.lane.b32.xlu0 %v1345, 16
      %v2468 = vpop.permute.xlu0 %2467
      %2469 = vrot.lane.b32.xlu0 %v1346, 16
      %v2470 = vpop.permute.xlu0 %2469
      %2471 = vrot.lane.b32.xlu0 %v1347, 16
      %v2472 = vpop.permute.xlu0 %2471
      %2473 = vrot.lane.b32.xlu0 %v1348, 16
      %v2474 = vpop.permute.xlu0 %2473
      %2475 = vrot.lane.b32.xlu0 %v1349, 16
      %v2476 = vpop.permute.xlu0 %2475
      %2477 = vrot.lane.b32.xlu0 %v1350, 16
      %v2478 = vpop.permute.xlu0 %2477
      %2479 = vrot.lane.b32.xlu0 %v1351, 16
      %v2480 = vpop.permute.xlu0 %2479
      %2481 = vrot.lane.b32.xlu0 %v1352, 16
      %v2482 = vpop.permute.xlu0 %2481
      %2483 = vrot.lane.b32.xlu0 %v1353, 16
      %v2484 = vpop.permute.xlu0 %2483
      %2485 = vrot.lane.b32.xlu0 %v1354, 16
      %v2486 = vpop.permute.xlu0 %2485
      %2487 = vrot.lane.b32.xlu0 %v1355, 16
      %v2488 = vpop.permute.xlu0 %2487
      %2489 = vrot.lane.b32.xlu0 %v1356, 16
      %v2490 = vpop.permute.xlu0 %2489
      %2491 = vrot.lane.b32.xlu0 %v1357, 16
      %v2492 = vpop.permute.xlu0 %2491
      %2493 = vrot.lane.b32.xlu0 %v1358, 16
      %v2494 = vpop.permute.xlu0 %2493
      %2495 = vrot.lane.b32.xlu0 %v1359, 16
      %v2496 = vpop.permute.xlu0 %2495
      %v2529 = vsel %vm1039, %v2275, %v2434
      %v2530 = vsel %vm1039, %v2280, %v2436
      %v2531 = vsel %vm1039, %v2285, %v2438
      %v2532 = vsel %vm1039, %v2290, %v2440
      %v2533 = vsel %vm1039, %v2295, %v2442
      %v2534 = vsel %vm1039, %v2300, %v2444
      %v2535 = vsel %vm1039, %v2305, %v2446
      %v2536 = vsel %vm1039, %v2310, %v2448
      %v2537 = vsel %vm1039, %v2315, %v2450
      %v2538 = vsel %vm1039, %v2320, %v2452
      %v2539 = vsel %vm1039, %v2325, %v2454
      %v2540 = vsel %vm1039, %v2330, %v2456
      %v2541 = vsel %vm1039, %v2335, %v2458
      %v2542 = vsel %vm1039, %v2340, %v2460
      %v2543 = vsel %vm1039, %v2345, %v2462
      %v2544 = vsel %vm1039, %v2350, %v2464
      %v2545 = vsel %vm1039, %v2355, %v2466
      %v2546 = vsel %vm1039, %v2360, %v2468
      %v2547 = vsel %vm1039, %v2365, %v2470
      %v2548 = vsel %vm1039, %v2370, %v2472
      %v2549 = vsel %vm1039, %v2375, %v2474
      %v2550 = vsel %vm1039, %v2380, %v2476
      %v2551 = vsel %vm1039, %v2385, %v2478
      %v2552 = vsel %vm1039, %v2390, %v2480
      %v2553 = vsel %vm1039, %v2395, %v2482
      %v2554 = vsel %vm1039, %v2400, %v2484
      %v2555 = vsel %vm1039, %v2405, %v2486
      %v2556 = vsel %vm1039, %v2410, %v2488
      %v2557 = vsel %vm1039, %v2415, %v2490
      %v2558 = vsel %vm1039, %v2420, %v2492
      %v2559 = vsel %vm1039, %v2425, %v2494
      %v2560 = vsel %vm1039, %v2430, %v2496
      %2561 = vst.msk [vmem:[%s280] sm:$0xff] %vm685, %v2529
      %2562 = vst.msk [vmem:[%s280 + $0x8] sm:$0xff] %vm685, %v2530
      %2563 = vst.msk [vmem:[%s280 + $0x10] sm:$0xff] %vm685, %v2531
      %2564 = vst.msk [vmem:[%s280 + $0x18] sm:$0xff] %vm685, %v2532
      %2565 = vst.msk [vmem:[%s280 + $0x20] sm:$0xff] %vm685, %v2533
      %2566 = vst.msk [vmem:[%s280 + $0x28] sm:$0xff] %vm685, %v2534
      %2567 = vst.msk [vmem:[%s280 + $0x30] sm:$0xff] %vm685, %v2535
      %2568 = vst.msk [vmem:[%s280 + $0x38] sm:$0xff] %vm685, %v2536
      %2569 = vst.msk [vmem:[%s280 + $0x40] sm:$0xff] %vm685, %v2537
      %2570 = vst.msk [vmem:[%s280 + $0x48] sm:$0xff] %vm685, %v2538
      %2571 = vst.msk [vmem:[%s280 + $0x50] sm:$0xff] %vm685, %v2539
      %2572 = vst.msk [vmem:[%s280 + $0x58] sm:$0xff] %vm685, %v2540
      %2573 = vst.msk [vmem:[%s280 + $0x60] sm:$0xff] %vm685, %v2541
      %2574 = vst.msk [vmem:[%s280 + $0x68] sm:$0xff] %vm685, %v2542
      %2575 = vst.msk [vmem:[%s280 + $0x70] sm:$0xff] %vm685, %v2543
      %2576 = vst.msk [vmem:[%s280 + $0x78] sm:$0xff] %vm685, %v2544
      %2577 = vst.msk [vmem:[%s280 + $0x80] sm:$0xff] %vm685, %v2545
      %2578 = vst.msk [vmem:[%s280 + $0x88] sm:$0xff] %vm685, %v2546
      %2579 = vst.msk [vmem:[%s280 + $0x90] sm:$0xff] %vm685, %v2547
      %2580 = vst.msk [vmem:[%s280 + $0x98] sm:$0xff] %vm685, %v2548
      %2581 = vst.msk [vmem:[%s280 + $0xa0] sm:$0xff] %vm685, %v2549
      %2582 = vst.msk [vmem:[%s280 + $0xa8] sm:$0xff] %vm685, %v2550
      %2583 = vst.msk [vmem:[%s280 + $0xb0] sm:$0xff] %vm685, %v2551
      %2584 = vst.msk [vmem:[%s280 + $0xb8] sm:$0xff] %vm685, %v2552
      %2585 = vst.msk [vmem:[%s280 + $0xc0] sm:$0xff] %vm685, %v2553
      %2586 = vst.msk [vmem:[%s280 + $0xc8] sm:$0xff] %vm685, %v2554
      %2587 = vst.msk [vmem:[%s280 + $0xd0] sm:$0xff] %vm685, %v2555
      %2588 = vst.msk [vmem:[%s280 + $0xd8] sm:$0xff] %vm685, %v2556
      %2589 = vst.msk [vmem:[%s280 + $0xe0] sm:$0xff] %vm685, %v2557
      %2590 = vst.msk [vmem:[%s280 + $0xe8] sm:$0xff] %vm685, %v2558
      %2591 = vst.msk [vmem:[%s280 + $0xf0] sm:$0xff] %vm685, %v2559
      %2592 = vst.msk [vmem:[%s280 + $0xf8] sm:$0xff] %vm685, %v2560
      %s2593 = smul.u32 32, %s18
      %p2594 = scmp.lt.s32.totalorder %s2593, 127
      %s2595 = scalar_select %p2594, %s2593, 127
      %s2596 = smul.addr %s2595, 8
      %s2597 = scalar_lea.vmem %s7, %s2596
      // Predicated region
      $region49: #{tpu_custom_call.1} parent=47 // pred_check
        %p2598 = pneg %p188
      $region50: #{tpu_custom_call.1} parent=47 // pred_check_branch
        %2600 = sbr.rel (%p2598) target = $region52
      $region51: #{tpu_custom_call.1} parent=47 // pred_region
        %s2601 = smul.u32 32, %s18
      $region52: #{tpu_custom_call.1} parent=47 // pred_fallthru
        _
    $region48: #{tpu_custom_call.1} parent=5 // pred_fallthru
      _
    %p2602 = scmp.le.s32.totalorder 2, %s13
    // Predicated region
    $region53: #{tpu_custom_call.1} parent=5 // pred_check
      %p2603 = pneg %p2602
    $region54: #{tpu_custom_call.1} parent=5 // pred_check_branch
      %2605 = sbr.rel (%p2603) target = $region56
    $region55: #{tpu_custom_call.1} parent=5 // pred_region
      %s2606 = ssub.s32 %s13, 2
      // Predicated region
      $region57: #{tpu_custom_call.1} parent=55 // pred_check
        %p2607 = pneg %p194
      $region58: #{tpu_custom_call.1} parent=55 // pred_check_branch
        %2609 = sbr.rel (%p2607) target = $region60
      $region59: #{tpu_custom_call.1} parent=55 // pred_region
        %s2610 = smul.u32 32, %s19
        %p2611 = scmp.lt.s32.totalorder %s2610, 127
        %s2612 = scalar_select %p2611, %s2610, 127
        %s2613 = smul.addr %s2612, 8
        %s2614 = scalar_lea.vmem %s7, %s2613
      $region60: #{tpu_custom_call.1} parent=55 // pred_fallthru
        _
    $region56: #{tpu_custom_call.1} parent=5 // pred_fallthru
      _
  $region6: #{tpu_custom_call.1} parent=0 // loop_footer
    %s17 = sadd.s32 1, %s13
  $region7: #{tpu_custom_call.1} parent=0 // loop_footer_branch
    %12 = sbr.rel target = $region3
  $region8: #{tpu_custom_call.1} parent=0 // loop_exit
    _

</llo_original>
